<compile_context>
chip_gen: v7x
topology: tpu7x:2x2x1
jax: 0.10.0
libtpu: 0.0.40
codegen_flags: <defaults>
</compile_context>

<pallas_src>
import math

import jax
import jax.numpy as jnp
from jax.experimental import pallas as pl
from jax.experimental.pallas import tpu as pltpu


def make_mha_kernel(batch_block, q_tile, kv_len, d_model, num_heads):
    d_k = d_model // num_heads

    def kernel(q_ref, k_ref, v_ref, wqkv_ref, bqkv_ref, wo_ref, bo_ref,
               o_ref, ctx_scr):
        # q_ref / o_ref : (batch_block, q_tile, D)
        # k_ref / v_ref : (batch_block, S, D)
        # wqkv_ref      : (3, D, D) bf16, (in, out) layout, Q weights pre-scaled
        # bqkv_ref      : (3, 1, D) f32, Q bias pre-scaled
        # wo_ref        : (D, D)    bf16, (in, out) layout
        # bo_ref        : (1, D)    f32
        # ctx_scr       : (q_tile, D) bf16 VMEM scratch (per-head context slab)
        wq_t = wqkv_ref[0]
        wk_t = wqkv_ref[1]
        wv_t = wqkv_ref[2]
        wo_t = wo_ref[...]

        # Hoist bias loads out of the batch/head loops (no re-broadcast per
        # unrolled iteration).
        bq = bqkv_ref[0]      # (1, D) f32, already * 1/sqrt(d_k)
        bk = bqkv_ref[1]
        bv = bqkv_ref[2]
        bo = bo_ref[...]      # (1, D) f32

        for bi in range(batch_block):
            q = q_ref[bi].astype(jnp.bfloat16)     # (q_tile, D)
            k = k_ref[bi].astype(jnp.bfloat16)     # (S, D)
            v = v_ref[bi].astype(jnp.bfloat16)

            # Projections: bf16 operands, f32 MXU accumulation, no transposes.
            # Bias add (+ Q scaling, folded into wq/bq by the wrapper) is fused
            # with an immediate bf16 cast so the f32 copies die here.
            Qb = (jnp.dot(q, wq_t, preferred_element_type=jnp.float32) + bq
                  ).astype(jnp.bfloat16)
            Kb = (jnp.dot(k, wk_t, preferred_element_type=jnp.float32) + bk
                  ).astype(jnp.bfloat16)
            Vb = (jnp.dot(v, wv_t, preferred_element_type=jnp.float32) + bv
                  ).astype(jnp.bfloat16)

            # TODO(synk): head-batched dot_general (or grouping ceil(128/d_k)
            # heads per MXU call) would raise MXU utilization when d_k < 128;
            # kept per-head 2-D matmuls with static lane slices here for
            # robust lowering.
            for h in range(num_heads):
                lo = h * d_k
                qh = Qb[:, lo:lo + d_k]            # (q_tile, d_k) lane slice
                kh = Kb[:, lo:lo + d_k]            # (S, d_k)
                vh = Vb[:, lo:lo + d_k]

                # scores = qh @ kh^T via dot_general -> no transposed copy of
                # kh is materialized in VMEM.
                s = jax.lax.dot_general(
                    qh, kh, (((1,), (1,)), ((), ())),
                    preferred_element_type=jnp.float32)     # (q_tile, S) f32

                # Softmax with one (q_tile, S) buffer: exponentiate in place,
                # then multiply by the approx reciprocal (EUP slot).
                s = jnp.exp(s - jnp.max(s, axis=-1, keepdims=True))
                s = s * pl.reciprocal(jnp.sum(s, axis=-1, keepdims=True),
                                      approx=True)

                # Write this head's context straight into its lane block of
                # the bf16 scratch slab (no list, no lane-wise concatenate).
                ctx_scr[:, lo:lo + d_k] = jnp.dot(
                    s.astype(jnp.bfloat16), vh,
                    preferred_element_type=jnp.float32).astype(jnp.bfloat16)

            out = jnp.dot(ctx_scr[...], wo_t,
                          preferred_element_type=jnp.float32) + bo
            o_ref[bi] = out.astype(o_ref.dtype)

    return kernel


def multi_head_attention(q, k, v, params, num_heads, *,
                         batch_block=1, q_tile=None):
    """q, k, v: (B, S, D) float32. params: PyTorch-style (out, in) weights + biases."""
    B, S, D = q.shape
    if D % num_heads != 0:
        raise ValueError("d_model must be divisible by num_heads")
    if B % batch_block != 0:
        raise ValueError(f"batch_block={batch_block} must divide B={B}")
    tq = S if q_tile is None else q_tile
    if S % tq != 0:
        raise ValueError(f"q_tile={tq} must divide S={S}")
    d_k = D // num_heads
    scale = 1.0 / math.sqrt(d_k)

    # Pre-transpose PyTorch (out, in) weights to (in, out) ONCE in the wrapper,
    # fold 1/sqrt(d_k) into the Q projection, cast weights to bf16, and stack
    # Q/K/V so a single resident (3, D, D) array covers all projections.
    wqkv = jnp.stack([params['wq'].T * scale,
                      params['wk'].T,
                      params['wv'].T]).astype(jnp.bfloat16)
    bqkv = jnp.stack([params['bq'] * scale,
                      params['bk'],
                      params['bv']]).reshape(3, 1, D).astype(jnp.float32)
    wo_t = params['wo'].T.astype(jnp.bfloat16)
    bo = params['bo'].reshape(1, D).astype(jnp.float32)

    kernel = make_mha_kernel(batch_block, tq, S, D, num_heads)

    grid = (B // batch_block, S // tq)
    qo_spec = pl.BlockSpec((batch_block, tq, D), lambda b, qi: (b, qi, 0))
    kv_spec = pl.BlockSpec((batch_block, S, D), lambda b, qi: (b, 0, 0))
    # Weights/biases: whole-array VMEM residency, loaded once, never
    # double-buffered (their contents do not change across grid steps).
    resident = pl.BlockSpec(memory_space=pltpu.MemorySpace.VMEM)

    # --- VMEM budget derived from actual block sizes (not a hard-coded cap) ---
    block_bytes = (
        2 * 2 * batch_block * tq * D * 4        # q, o blocks, double-buffered
        + 2 * 2 * batch_block * S * D * 4       # k, v blocks, double-buffered
        + (3 * D * D + D * D) * 2 + 4 * D * 4   # resident weights + biases
        + 3 * S * D * 2                         # Qb / Kb / Vb bf16
        + tq * S * 4                            # one scores buffer (f32)
        + tq * D * 2                            # ctx scratch bf16
        + 2 * tq * D * 4                        # f32 output temp headroom
    )
    try:
        vmem_cap = int(getattr(pltpu.get_tpu_info(), "vmem_capacity_bytes",
                               64 * 1024 * 1024))
    except Exception:
        vmem_cap = 64 * 1024 * 1024             # conservative (v7x per-TC)
    vmem_limit = int(min(0.75 * vmem_cap,
                         max(32 * 1024 * 1024, 2 * block_bytes)))

    flops = B * (8 * S * D * D + 4 * num_heads * S * S * d_k)
    transcendentals = B * num_heads * S * S
    bytes_accessed = 4 * B * S * D * 4 + 4 * D * D * 2 + 4 * D * 4

    return pl.pallas_call(
        kernel,
        out_shape=jax.ShapeDtypeStruct((B, S, D), q.dtype),
        grid_spec=pltpu.PrefetchScalarGridSpec(
            num_scalar_prefetch=0,
            grid=grid,
            in_specs=[qo_spec, kv_spec, kv_spec,
                      resident, resident, resident, resident],
            out_specs=qo_spec,
            scratch_shapes=[pltpu.VMEM((tq, D), jnp.bfloat16)],
        ),
        compiler_params=pltpu.CompilerParams(
            dimension_semantics=("parallel", "parallel"),
            vmem_limit_bytes=vmem_limit),
        cost_estimate=pl.CostEstimate(
            flops=flops,
            transcendentals=transcendentals,
            bytes_accessed=bytes_accessed),
    )(q, k, v, wqkv, bqkv, wo_t, bo)


def _reference_mha(q, k, v, params, num_heads):
    """Plain-JAX f32 reference mirroring the PyTorch forward, for validation."""
    B, S, D = q.shape
    d_k = D // num_heads

    def lin(x, w, b):
        return x @ w.T + b

    def split(x):
        return x.reshape(B, S, num_heads, d_k).transpose(0, 2, 1, 3)

    Q = split(lin(q, params['wq'], params['bq']))
    K = split(lin(k, params['wk'], params['bk']))
    V = split(lin(v, params['wv'], params['bv']))
    scores = jnp.einsum('bhqd,bhkd->bhqk', Q, K) / math.sqrt(d_k)
    probs = jax.nn.softmax(scores, axis=-1)
    ctx = jnp.einsum('bhqk,bhkd->bhqd', probs, V)
    ctx = ctx.transpose(0, 2, 1, 3).reshape(B, S, D)
    return lin(ctx, params['wo'], params['bo'])


if __name__ == "__main__":
    B, S, D, H = 2, 8, 32, 4

    key = jax.random.PRNGKey(0)
    keys = jax.random.split(key, 11)

    # Deterministic parameter init (PyTorch-Linear-style uniform +/- 1/sqrt(fan_in)).
    bound = 1.0 / math.sqrt(D)
    params = {
        'wq': jax.random.uniform(keys[0], (D, D), jnp.float32, -bound, bound),
        'bq': jax.random.uniform(keys[1], (D,), jnp.float32, -bound, bound),
        'wk': jax.random.uniform(keys[2], (D, D), jnp.float32, -bound, bound),
        'bk': jax.random.uniform(keys[3], (D,), jnp.float32, -bound, bound),
        'wv': jax.random.uniform(keys[4], (D, D), jnp.float32, -bound, bound),
        'bv': jax.random.uniform(keys[5], (D,), jnp.float32, -bound, bound),
        'wo': jax.random.uniform(keys[6], (D, D), jnp.float32, -bound, bound),
        'bo': jax.random.uniform(keys[7], (D,), jnp.float32, -bound, bound),
    }

    q = jax.random.normal(keys[8], (B, S, D), jnp.float32)
    k = jax.random.normal(keys[9], (B, S, D), jnp.float32)
    v = jax.random.normal(keys[10], (B, S, D), jnp.float32)

    out = multi_head_attention(q, k, v, params, num_heads=H)
    out = jax.block_until_ready(out)

    ref = _reference_mha(q, k, v, params, num_heads=H)
    assert out.shape == (B, S, D)
    # Tolerance accounts for bf16 MXU operands (f32 accumulation) + approx reciprocal.
    assert jnp.allclose(out, ref, atol=2e-2, rtol=2e-2), "mismatch vs reference"

    print("KERNEL_OK")
</pallas_src>

<mosaic_0001>
module attributes {stable_mosaic.version = 11 : i64} {
  func.func @kernel(%arg0: i32, %arg1: i32, %arg2: memref<1x8x32xf32, #tpu.memory_space<vmem>>, %arg3: memref<1x8x32xf32, #tpu.memory_space<vmem>>, %arg4: memref<1x8x32xf32, #tpu.memory_space<vmem>>, %arg5: memref<3x32x32xbf16, #tpu.memory_space<vmem>>, %arg6: memref<3x1x32xf32, #tpu.memory_space<vmem>>, %arg7: memref<32x32xbf16, #tpu.memory_space<vmem>>, %arg8: memref<1x32xf32, #tpu.memory_space<vmem>>, %arg9: memref<1x8x32xf32, #tpu.memory_space<vmem>>, %arg10: memref<8x32xbf16, #tpu.memory_space<vmem>>) attributes {dimension_semantics = [#tpu.dimension_semantics<parallel>, #tpu.dimension_semantics<parallel>], iteration_bounds = array<i64: 2, 1>, scalar_prefetch = 0 : i64, scratch_operands = 1 : i64, tpu.core_type = #tpu.core_type<tc>, window_params = [{transform_indices = @transform_0, window_bounds = array<i64: 1, 8, 32>}, {transform_indices = @transform_1, window_bounds = array<i64: 1, 8, 32>}, {transform_indices = @transform_2, window_bounds = array<i64: 1, 8, 32>}, {pipeline_mode = #tpu.pipeline_mode<synchronous>, transform_indices = @transform_3, window_bounds = array<i64: 3, 32, 32>}, {pipeline_mode = #tpu.pipeline_mode<synchronous>, transform_indices = @transform_4, window_bounds = array<i64: 3, 1, 32>}, {pipeline_mode = #tpu.pipeline_mode<synchronous>, transform_indices = @transform_5, window_bounds = array<i64: 32, 32>}, {pipeline_mode = #tpu.pipeline_mode<synchronous>, transform_indices = @transform_6, window_bounds = array<i64: 1, 32>}, {transform_indices = @transform_7, window_bounds = array<i64: 1, 8, 32>}]} {
    %c0 = arith.constant 0 : index
    %c0_0 = arith.constant 0 : index
    %c0_1 = arith.constant 0 : index
    %0 = vector.load %arg5[%c0, %c0_0, %c0_1] : memref<3x32x32xbf16, #tpu.memory_space<vmem>>, vector<1x32x32xbf16>
    %1 = vector.shape_cast %0 : vector<1x32x32xbf16> to vector<32x32xbf16>
    %c1 = arith.constant 1 : index
    %c0_2 = arith.constant 0 : index
    %c0_3 = arith.constant 0 : index
    %2 = vector.load %arg5[%c1, %c0_2, %c0_3] : memref<3x32x32xbf16, #tpu.memory_space<vmem>>, vector<1x32x32xbf16>
    %3 = vector.shape_cast %2 : vector<1x32x32xbf16> to vector<32x32xbf16>
    %c2 = arith.constant 2 : index
    %c0_4 = arith.constant 0 : index
    %c0_5 = arith.constant 0 : index
    %4 = vector.load %arg5[%c2, %c0_4, %c0_5] : memref<3x32x32xbf16, #tpu.memory_space<vmem>>, vector<1x32x32xbf16>
    %5 = vector.shape_cast %4 : vector<1x32x32xbf16> to vector<32x32xbf16>
    %c0_6 = arith.constant 0 : index
    %c0_7 = arith.constant 0 : index
    %6 = vector.load %arg7[%c0_6, %c0_7] : memref<32x32xbf16, #tpu.memory_space<vmem>>, vector<32x32xbf16>
    %c0_8 = arith.constant 0 : index
    %c0_9 = arith.constant 0 : index
    %c0_10 = arith.constant 0 : index
    %7 = vector.load %arg6[%c0_8, %c0_9, %c0_10] : memref<3x1x32xf32, #tpu.memory_space<vmem>>, vector<1x1x32xf32>
    %8 = vector.shape_cast %7 : vector<1x1x32xf32> to vector<1x32xf32>
    %c1_11 = arith.constant 1 : index
    %c0_12 = arith.constant 0 : index
    %c0_13 = arith.constant 0 : index
    %9 = vector.load %arg6[%c1_11, %c0_12, %c0_13] : memref<3x1x32xf32, #tpu.memory_space<vmem>>, vector<1x1x32xf32>
    %10 = vector.shape_cast %9 : vector<1x1x32xf32> to vector<1x32xf32>
    %c2_14 = arith.constant 2 : index
    %c0_15 = arith.constant 0 : index
    %c0_16 = arith.constant 0 : index
    %11 = vector.load %arg6[%c2_14, %c0_15, %c0_16] : memref<3x1x32xf32, #tpu.memory_space<vmem>>, vector<1x1x32xf32>
    %12 = vector.shape_cast %11 : vector<1x1x32xf32> to vector<1x32xf32>
    %c0_17 = arith.constant 0 : index
    %c0_18 = arith.constant 0 : index
    %13 = vector.load %arg8[%c0_17, %c0_18] : memref<1x32xf32, #tpu.memory_space<vmem>>, vector<1x32xf32>
    %c0_19 = arith.constant 0 : index
    %c0_20 = arith.constant 0 : index
    %c0_21 = arith.constant 0 : index
    %14 = vector.load %arg2[%c0_19, %c0_20, %c0_21] : memref<1x8x32xf32, #tpu.memory_space<vmem>>, vector<1x8x32xf32>
    %15 = vector.shape_cast %14 : vector<1x8x32xf32> to vector<8x32xf32>
    %16 = arith.truncf %15 : vector<8x32xf32> to vector<8x32xbf16>
    %c0_22 = arith.constant 0 : index
    %c0_23 = arith.constant 0 : index
    %c0_24 = arith.constant 0 : index
    %17 = vector.load %arg3[%c0_22, %c0_23, %c0_24] : memref<1x8x32xf32, #tpu.memory_space<vmem>>, vector<1x8x32xf32>
    %18 = vector.shape_cast %17 : vector<1x8x32xf32> to vector<8x32xf32>
    %19 = arith.truncf %18 : vector<8x32xf32> to vector<8x32xbf16>
    %c0_25 = arith.constant 0 : index
    %c0_26 = arith.constant 0 : index
    %c0_27 = arith.constant 0 : index
    %20 = vector.load %arg4[%c0_25, %c0_26, %c0_27] : memref<1x8x32xf32, #tpu.memory_space<vmem>>, vector<1x8x32xf32>
    %21 = vector.shape_cast %20 : vector<1x8x32xf32> to vector<8x32xf32>
    %22 = arith.truncf %21 : vector<8x32xf32> to vector<8x32xbf16>
    %cst = arith.constant dense<0.000000e+00> : vector<8x32xf32>
    %23 = tpu.matmul %16, %1, %cst {dimension_numbers = #tpu.dot_dimension_numbers<[1], [0], [0], [1], [0, 0, 1, 1], [], []>} : vector<8x32xbf16>, vector<32x32xbf16>, vector<8x32xf32> -> vector<8x32xf32>
    %24 = vector.broadcast %8 : vector<1x32xf32> to vector<8x32xf32>
    %25 = arith.addf %23, %24 : vector<8x32xf32>
    %26 = arith.truncf %25 : vector<8x32xf32> to vector<8x32xbf16>
    %cst_28 = arith.constant dense<0.000000e+00> : vector<8x32xf32>
    %27 = tpu.matmul %19, %3, %cst_28 {dimension_numbers = #tpu.dot_dimension_numbers<[1], [0], [0], [1], [0, 0, 1, 1], [], []>} : vector<8x32xbf16>, vector<32x32xbf16>, vector<8x32xf32> -> vector<8x32xf32>
    %28 = vector.broadcast %10 : vector<1x32xf32> to vector<8x32xf32>
    %29 = arith.addf %27, %28 : vector<8x32xf32>
    %30 = arith.truncf %29 : vector<8x32xf32> to vector<8x32xbf16>
    %cst_29 = arith.constant dense<0.000000e+00> : vector<8x32xf32>
    %31 = tpu.matmul %22, %5, %cst_29 {dimension_numbers = #tpu.dot_dimension_numbers<[1], [0], [0], [1], [0, 0, 1, 1], [], []>} : vector<8x32xbf16>, vector<32x32xbf16>, vector<8x32xf32> -> vector<8x32xf32>
    %32 = vector.broadcast %12 : vector<1x32xf32> to vector<8x32xf32>
    %33 = arith.addf %31, %32 : vector<8x32xf32>
    %34 = arith.truncf %33 : vector<8x32xf32> to vector<8x32xbf16>
    %35 = vector.extract_strided_slice %26 {offsets = [0, 0], sizes = [8, 8], strides = [1, 1]} : vector<8x32xbf16> to vector<8x8xbf16>
    %36 = vector.extract_strided_slice %30 {offsets = [0, 0], sizes = [8, 8], strides = [1, 1]} : vector<8x32xbf16> to vector<8x8xbf16>
    %37 = vector.extract_strided_slice %34 {offsets = [0, 0], sizes = [8, 8], strides = [1, 1]} : vector<8x32xbf16> to vector<8x8xbf16>
    %cst_30 = arith.constant dense<0.000000e+00> : vector<8x8xf32>
    %38 = tpu.matmul %35, %36, %cst_30 {dimension_numbers = #tpu.dot_dimension_numbers<[1], [1], [0], [0], [0, 0, 1, 0], [], []>} : vector<8x8xbf16>, vector<8x8xbf16>, vector<8x8xf32> -> vector<8x8xf32>
    %cst_31 = arith.constant dense<0xFF800000> : vector<8xf32>
    %39 = vector.multi_reduction <maximumf>, %38, %cst_31 [1] : vector<8x8xf32> to vector<8xf32>
    %40 = vector.shape_cast %39 : vector<8xf32> to vector<8x1xf32>
    %41 = vector.broadcast %40 : vector<8x1xf32> to vector<8x8xf32>
    %42 = arith.subf %38, %41 : vector<8x8xf32>
    %43 = math.exp %42 : vector<8x8xf32>
    %cst_32 = arith.constant dense<0.000000e+00> : vector<8xf32>
    %44 = vector.multi_reduction <add>, %43, %cst_32 [1] : vector<8x8xf32> to vector<8xf32>
    %45 = vector.shape_cast %44 : vector<8xf32> to vector<8x1xf32>
    %46 = tpu.reciprocal %45 {approx = true} : vector<8x1xf32> -> vector<8x1xf32>
    %47 = vector.broadcast %46 : vector<8x1xf32> to vector<8x8xf32>
    %48 = arith.mulf %43, %47 : vector<8x8xf32>
    %49 = arith.truncf %48 : vector<8x8xf32> to vector<8x8xbf16>
    %cst_33 = arith.constant dense<0.000000e+00> : vector<8x8xf32>
    %50 = tpu.matmul %49, %37, %cst_33 {dimension_numbers = #tpu.dot_dimension_numbers<[1], [0], [0], [1], [0, 0, 1, 1], [], []>} : vector<8x8xbf16>, vector<8x8xbf16>, vector<8x8xf32> -> vector<8x8xf32>
    %51 = arith.truncf %50 : vector<8x8xf32> to vector<8x8xbf16>
    %c0_34 = arith.constant 0 : index
    %c0_35 = arith.constant 0 : index
    %52 = vector.load %arg10[%c0_34, %c0_35] : memref<8x32xbf16, #tpu.memory_space<vmem>>, vector<8x8xbf16>
    tpu.vector_store %arg10[%c0_34, %c0_35], %51 {strides = array<i32>} : memref<8x32xbf16, #tpu.memory_space<vmem>>, vector<8x8xbf16>,
    %53 = vector.extract_strided_slice %26 {offsets = [0, 8], sizes = [8, 8], strides = [1, 1]} : vector<8x32xbf16> to vector<8x8xbf16>
    %54 = vector.extract_strided_slice %30 {offsets = [0, 8], sizes = [8, 8], strides = [1, 1]} : vector<8x32xbf16> to vector<8x8xbf16>
    %55 = vector.extract_strided_slice %34 {offsets = [0, 8], sizes = [8, 8], strides = [1, 1]} : vector<8x32xbf16> to vector<8x8xbf16>
    %cst_36 = arith.constant dense<0.000000e+00> : vector<8x8xf32>
    %56 = tpu.matmul %53, %54, %cst_36 {dimension_numbers = #tpu.dot_dimension_numbers<[1], [1], [0], [0], [0, 0, 1, 0], [], []>} : vector<8x8xbf16>, vector<8x8xbf16>, vector<8x8xf32> -> vector<8x8xf32>
    %cst_37 = arith.constant dense<0xFF800000> : vector<8xf32>
    %57 = vector.multi_reduction <maximumf>, %56, %cst_37 [1] : vector<8x8xf32> to vector<8xf32>
    %58 = vector.shape_cast %57 : vector<8xf32> to vector<8x1xf32>
    %59 = vector.broadcast %58 : vector<8x1xf32> to vector<8x8xf32>
    %60 = arith.subf %56, %59 : vector<8x8xf32>
    %61 = math.exp %60 : vector<8x8xf32>
    %cst_38 = arith.constant dense<0.000000e+00> : vector<8xf32>
    %62 = vector.multi_reduction <add>, %61, %cst_38 [1] : vector<8x8xf32> to vector<8xf32>
    %63 = vector.shape_cast %62 : vector<8xf32> to vector<8x1xf32>
    %64 = tpu.reciprocal %63 {approx = true} : vector<8x1xf32> -> vector<8x1xf32>
    %65 = vector.broadcast %64 : vector<8x1xf32> to vector<8x8xf32>
    %66 = arith.mulf %61, %65 : vector<8x8xf32>
    %67 = arith.truncf %66 : vector<8x8xf32> to vector<8x8xbf16>
    %cst_39 = arith.constant dense<0.000000e+00> : vector<8x8xf32>
    %68 = tpu.matmul %67, %55, %cst_39 {dimension_numbers = #tpu.dot_dimension_numbers<[1], [0], [0], [1], [0, 0, 1, 1], [], []>} : vector<8x8xbf16>, vector<8x8xbf16>, vector<8x8xf32> -> vector<8x8xf32>
    %69 = arith.truncf %68 : vector<8x8xf32> to vector<8x8xbf16>
    %c0_40 = arith.constant 0 : index
    %c8 = arith.constant 8 : index
    %70 = vector.load %arg10[%c0_40, %c8] : memref<8x32xbf16, #tpu.memory_space<vmem>>, vector<8x8xbf16>
    tpu.vector_store %arg10[%c0_40, %c8], %69 {strides = array<i32>} : memref<8x32xbf16, #tpu.memory_space<vmem>>, vector<8x8xbf16>,
    %71 = vector.extract_strided_slice %26 {offsets = [0, 16], sizes = [8, 8], strides = [1, 1]} : vector<8x32xbf16> to vector<8x8xbf16>
    %72 = vector.extract_strided_slice %30 {offsets = [0, 16], sizes = [8, 8], strides = [1, 1]} : vector<8x32xbf16> to vector<8x8xbf16>
    %73 = vector.extract_strided_slice %34 {offsets = [0, 16], sizes = [8, 8], strides = [1, 1]} : vector<8x32xbf16> to vector<8x8xbf16>
    %cst_41 = arith.constant dense<0.000000e+00> : vector<8x8xf32>
    %74 = tpu.matmul %71, %72, %cst_41 {dimension_numbers = #tpu.dot_dimension_numbers<[1], [1], [0], [0], [0, 0, 1, 0], [], []>} : vector<8x8xbf16>, vector<8x8xbf16>, vector<8x8xf32> -> vector<8x8xf32>
    %cst_42 = arith.constant dense<0xFF800000> : vector<8xf32>
    %75 = vector.multi_reduction <maximumf>, %74, %cst_42 [1] : vector<8x8xf32> to vector<8xf32>
    %76 = vector.shape_cast %75 : vector<8xf32> to vector<8x1xf32>
    %77 = vector.broadcast %76 : vector<8x1xf32> to vector<8x8xf32>
    %78 = arith.subf %74, %77 : vector<8x8xf32>
    %79 = math.exp %78 : vector<8x8xf32>
    %cst_43 = arith.constant dense<0.000000e+00> : vector<8xf32>
    %80 = vector.multi_reduction <add>, %79, %cst_43 [1] : vector<8x8xf32> to vector<8xf32>
    %81 = vector.shape_cast %80 : vector<8xf32> to vector<8x1xf32>
    %82 = tpu.reciprocal %81 {approx = true} : vector<8x1xf32> -> vector<8x1xf32>
    %83 = vector.broadcast %82 : vector<8x1xf32> to vector<8x8xf32>
    %84 = arith.mulf %79, %83 : vector<8x8xf32>
    %85 = arith.truncf %84 : vector<8x8xf32> to vector<8x8xbf16>
    %cst_44 = arith.constant dense<0.000000e+00> : vector<8x8xf32>
    %86 = tpu.matmul %85, %73, %cst_44 {dimension_numbers = #tpu.dot_dimension_numbers<[1], [0], [0], [1], [0, 0, 1, 1], [], []>} : vector<8x8xbf16>, vector<8x8xbf16>, vector<8x8xf32> -> vector<8x8xf32>
    %87 = arith.truncf %86 : vector<8x8xf32> to vector<8x8xbf16>
    %c0_45 = arith.constant 0 : index
    %c16 = arith.constant 16 : index
    %88 = vector.load %arg10[%c0_45, %c16] : memref<8x32xbf16, #tpu.memory_space<vmem>>, vector<8x8xbf16>
    tpu.vector_store %arg10[%c0_45, %c16], %87 {strides = array<i32>} : memref<8x32xbf16, #tpu.memory_space<vmem>>, vector<8x8xbf16>,
    %89 = vector.extract_strided_slice %26 {offsets = [0, 24], sizes = [8, 8], strides = [1, 1]} : vector<8x32xbf16> to vector<8x8xbf16>
    %90 = vector.extract_strided_slice %30 {offsets = [0, 24], sizes = [8, 8], strides = [1, 1]} : vector<8x32xbf16> to vector<8x8xbf16>
    %91 = vector.extract_strided_slice %34 {offsets = [0, 24], sizes = [8, 8], strides = [1, 1]} : vector<8x32xbf16> to vector<8x8xbf16>
    %cst_46 = arith.constant dense<0.000000e+00> : vector<8x8xf32>
    %92 = tpu.matmul %89, %90, %cst_46 {dimension_numbers = #tpu.dot_dimension_numbers<[1], [1], [0], [0], [0, 0, 1, 0], [], []>} : vector<8x8xbf16>, vector<8x8xbf16>, vector<8x8xf32> -> vector<8x8xf32>
    %cst_47 = arith.constant dense<0xFF800000> : vector<8xf32>
    %93 = vector.multi_reduction <maximumf>, %92, %cst_47 [1] : vector<8x8xf32> to vector<8xf32>
    %94 = vector.shape_cast %93 : vector<8xf32> to vector<8x1xf32>
    %95 = vector.broadcast %94 : vector<8x1xf32> to vector<8x8xf32>
    %96 = arith.subf %92, %95 : vector<8x8xf32>
    %97 = math.exp %96 : vector<8x8xf32>
    %cst_48 = arith.constant dense<0.000000e+00> : vector<8xf32>
    %98 = vector.multi_reduction <add>, %97, %cst_48 [1] : vector<8x8xf32> to vector<8xf32>
    %99 = vector.shape_cast %98 : vector<8xf32> to vector<8x1xf32>
    %100 = tpu.reciprocal %99 {approx = true} : vector<8x1xf32> -> vector<8x1xf32>
    %101 = vector.broadcast %100 : vector<8x1xf32> to vector<8x8xf32>
    %102 = arith.mulf %97, %101 : vector<8x8xf32>
    %103 = arith.truncf %102 : vector<8x8xf32> to vector<8x8xbf16>
    %cst_49 = arith.constant dense<0.000000e+00> : vector<8x8xf32>
    %104 = tpu.matmul %103, %91, %cst_49 {dimension_numbers = #tpu.dot_dimension_numbers<[1], [0], [0], [1], [0, 0, 1, 1], [], []>} : vector<8x8xbf16>, vector<8x8xbf16>, vector<8x8xf32> -> vector<8x8xf32>
    %105 = arith.truncf %104 : vector<8x8xf32> to vector<8x8xbf16>
    %c0_50 = arith.constant 0 : index
    %c24 = arith.constant 24 : index
    %106 = vector.load %arg10[%c0_50, %c24] : memref<8x32xbf16, #tpu.memory_space<vmem>>, vector<8x8xbf16>
    tpu.vector_store %arg10[%c0_50, %c24], %105 {strides = array<i32>} : memref<8x32xbf16, #tpu.memory_space<vmem>>, vector<8x8xbf16>,
    %c0_51 = arith.constant 0 : index
    %c0_52 = arith.constant 0 : index
    %107 = vector.load %arg10[%c0_51, %c0_52] : memref<8x32xbf16, #tpu.memory_space<vmem>>, vector<8x32xbf16>
    %cst_53 = arith.constant dense<0.000000e+00> : vector<8x32xf32>
    %108 = tpu.matmul %107, %6, %cst_53 {dimension_numbers = #tpu.dot_dimension_numbers<[1], [0], [0], [1], [0, 0, 1, 1], [], []>} : vector<8x32xbf16>, vector<32x32xbf16>, vector<8x32xf32> -> vector<8x32xf32>
    %109 = vector.broadcast %13 : vector<1x32xf32> to vector<8x32xf32>
    %110 = arith.addf %108, %109 : vector<8x32xf32>
    %c0_54 = arith.constant 0 : index
    %c0_55 = arith.constant 0 : index
    %c0_56 = arith.constant 0 : index
    %111 = vector.load %arg9[%c0_54, %c0_55, %c0_56] : memref<1x8x32xf32, #tpu.memory_space<vmem>>, vector<1x8x32xf32>
    %112 = vector.shape_cast %111 : vector<1x8x32xf32> to vector<8x32xf32>
    %113 = vector.shape_cast %110 : vector<8x32xf32> to vector<1x8x32xf32>
    tpu.vector_store %arg9[%c0_54, %c0_55, %c0_56], %113 {strides = array<i32>} : memref<1x8x32xf32, #tpu.memory_space<vmem>>, vector<1x8x32xf32>,
    return
  }
  func.func @transform_0(%arg0: i32, %arg1: i32) -> (i32, i32, i32) {
    %c0_i32 = arith.constant 0 : i32
    %c0_i32_0 = arith.constant 0 : i32
    return %arg0, %arg1, %c0_i32 : i32, i32, i32
  }
  func.func @transform_1(%arg0: i32, %arg1: i32) -> (i32, i32, i32) {
    %c0_i32 = arith.constant 0 : i32
    %c0_i32_0 = arith.constant 0 : i32
    %c0_i32_1 = arith.constant 0 : i32
    return %arg0, %c0_i32, %c0_i32_0 : i32, i32, i32
  }
  func.func @transform_2(%arg0: i32, %arg1: i32) -> (i32, i32, i32) {
    %c0_i32 = arith.constant 0 : i32
    %c0_i32_0 = arith.constant 0 : i32
    %c0_i32_1 = arith.constant 0 : i32
    return %arg0, %c0_i32, %c0_i32_0 : i32, i32, i32
  }
  func.func @transform_3(%arg0: i32, %arg1: i32) -> (i32, i32, i32) {
    %c0_i32 = arith.constant 0 : i32
    %c0_i32_0 = arith.constant 0 : i32
    %c0_i32_1 = arith.constant 0 : i32
    %c0_i32_2 = arith.constant 0 : i32
    return %c0_i32, %c0_i32_0, %c0_i32_1 : i32, i32, i32
  }
  func.func @transform_4(%arg0: i32, %arg1: i32) -> (i32, i32, i32) {
    %c0_i32 = arith.constant 0 : i32
    %c0_i32_0 = arith.constant 0 : i32
    %c0_i32_1 = arith.constant 0 : i32
    %c0_i32_2 = arith.constant 0 : i32
    return %c0_i32, %c0_i32_0, %c0_i32_1 : i32, i32, i32
  }
  func.func @transform_5(%arg0: i32, %arg1: i32) -> (i32, i32) {
    %c0_i32 = arith.constant 0 : i32
    %c0_i32_0 = arith.constant 0 : i32
    %c0_i32_1 = arith.constant 0 : i32
    return %c0_i32, %c0_i32_0 : i32, i32
  }
  func.func @transform_6(%arg0: i32, %arg1: i32) -> (i32, i32) {
    %c0_i32 = arith.constant 0 : i32
    %c0_i32_0 = arith.constant 0 : i32
    %c0_i32_1 = arith.constant 0 : i32
    return %c0_i32, %c0_i32_0 : i32, i32
  }
  func.func @transform_7(%arg0: i32, %arg1: i32) -> (i32, i32, i32) {
    %c0_i32 = arith.constant 0 : i32
    %c0_i32_0 = arith.constant 0 : i32
    return %arg0, %arg1, %c0_i32 : i32, i32, i32
  }
}

</mosaic_0001>

<llo_original>
// kernel: tpu_custom_call.1
$region0: #{tpu_custom_call.1}
  #allocation0 [shape = 'u32[]', space=smem, size = 0x4, offset = 0x4, fixed_abs, tag = 'smem constant byte address 0x4 - core index']
  #allocation1 [shape = 'u32[144,128]{1,0:T(1,128)}', space=vmem, size = 0x12000, scoped, tag = 'internal scratch']
  #allocation2 [shape = 'bf16[8,32]{1,0:T(8,128)(2,1)}', space=vmem, size = 0x800, scoped, tag = 'scratch operand']
  %s0 = inlined_call_operand.hbm [shape: f32[2,8,32], index: 0, kind: input, shape index: {}]
  %s1 = inlined_call_operand.hbm [shape: f32[2,8,32], index: 1, kind: input, shape index: {}]
  %s2 = inlined_call_operand.hbm [shape: f32[2,8,32], index: 2, kind: input, shape index: {}]
  %s3 = inlined_call_operand.hbm [shape: bf16[3,32,32], index: 3, kind: input, shape index: {}]
  %s4 = inlined_call_operand.hbm [shape: f32[3,1,32], index: 4, kind: input, shape index: {}]
  %s5 = inlined_call_operand.vmem [shape: bf16[32,32], index: 5, kind: input, shape index: {}]
  %s6 = inlined_call_operand.vmem [shape: f32[1,32], index: 6, kind: input, shape index: {}]
  %s7 = inlined_call_operand.hbm [shape: f32[2,8,32], index: 7, kind: output, shape index: {}]
  %s8 = sld [smem:[#allocation0]]
  $region81: #{tpu_custom_call.1} parent=0
    _
  %s10 = ssub.s32 1, %s8
  %s11 = scalar_select 0, %s10, %s8
  $region1: #{tpu_custom_call.1} parent=0
    #allocation3 [shape = 'u8[8192]{0}', space=vmem, size = 0x2000, scoped, tag = 'input window, operand 0']
    #allocation4 [shape = 's32[2]{0}', space=sflag, size = 0x8, scoped, tag = 'scoped memory for tpu_custom_call.1']
    #allocation5 [shape = 's32[2]{0}', space=sflag, size = 0x8, scoped, tag = 'scoped memory for tpu_custom_call.1']
    #allocation6 [shape = 'u8[8192]{0}', space=vmem, size = 0x2000, scoped, tag = 'input window, operand 1']
    #allocation7 [shape = 's32[2]{0}', space=sflag, size = 0x8, scoped, tag = 'scoped memory for tpu_custom_call.1']
    #allocation8 [shape = 'u8[8192]{0}', space=vmem, size = 0x2000, scoped, tag = 'input window, operand 2']
    #allocation9 [shape = 'u8[24576]{0}', space=vmem, size = 0x6000, scoped, tag = 'input window, operand 3, single buffered']
    #allocation10 [shape = 's32[1]{0}', space=sflag, size = 0x4, scoped, tag = 'scoped memory for tpu_custom_call.1']
    #allocation11 [shape = 'u8[1536]{0}', space=vmem, size = 0x800, scoped, tag = 'input window, operand 4, single buffered']
    #allocation12 [shape = 'u8[8192]{0}', space=vmem, size = 0x2000, scoped, tag = 'output window, operand 0']
    %12 = vsyncpa [#allocation4], 0
    %s13 = scalar_lea.sflag [#allocation4], 1
    %14 = vsyncpa %s13, 0
    %15 = vsyncpa [#allocation7], 0
    %s16 = scalar_lea.sflag [#allocation7], 1
    %17 = vsyncpa %s16, 0
    %18 = vsyncpa [#allocation10], 0
    %19 = vsyncpa [#allocation5], 0
    %s20 = scalar_lea.sflag [#allocation5], 1
    %21 = vsyncpa %s20, 0
    loop: start=0, step=1, limit=4
    $region2: #{tpu_custom_call.1} parent=1 // loop_pre_header
      _
    $region3: #{tpu_custom_call.1} parent=1 // loop_header
      %s23 = sphi 0, %s27
      %p24 = scmp.ge.s32.totalorder %s23, 4
      %s30 = sphi 0, %s42
      %s31 = sphi 0, %s38
      %s32 = sphi 0, %s30
      %s33 = sphi 0, %s31
      %s34 = sphi 0, %s32
      %s35 = sphi 0, %s33
      %s47 = sphi 0, %s49
      %s50 = sphi 0, %s47
      %s51 = sphi 0, %s50
      %s67 = sphi 0, %s51
      %s73 = sphi 0, %s75
      %s76 = sphi 0, %s73
      %s77 = sphi 0, %s76
      %s93 = sphi 0, %s77
      %s99 = sphi 0, %s101
      %s102 = sphi 0, %s99
      %s103 = sphi 0, %s102
      %s119 = sphi 0, %s103
      %s123 = sphi 0, %s123
      %s125 = sphi 0, %s123
      %s126 = sphi 0, %s125
      %s140 = sphi 0, %s126
      %s144 = sphi 0, %s144
      %s146 = sphi 0, %s144
      %s147 = sphi 0, %s146
      %s161 = sphi 0, %s147
      %s165 = sphi 0, %s165
      %s167 = sphi 0, %s165
      %s168 = sphi 0, %s167
      %s182 = sphi 0, %s168
      %s186 = sphi 0, %s186
      %s188 = sphi 0, %s186
      %s189 = sphi 0, %s188
      %s203 = sphi 0, %s189
      %s211 = sphi 0, %s213
      %s214 = sphi 0, %s211
      %s215 = sphi 0, %s214
      %s231 = sphi 0, %s215
    $region4: #{tpu_custom_call.1} parent=1 // loop_header_branch
      %26 = sbr.rel (%p24) target = $region8
    $region5: #{tpu_custom_call.1} parent=1 // loop_body
      %s28 = ssub.s32 %s23, 1
      %s29 = ssub.s32 %s23, 2
      %s36 = sadd.s32 1, %s31
      %p37 = scmp.ge.s32.totalorder %s36, 1
      %s38 = scalar_select %p37, 0, %s36
      %s39 = sadd.s32 1, %s30
      %s40 = scalar_select %p37, %s39, %s30
      %p41 = scmp.ge.s32.totalorder %s40, 2
      %s42 = scalar_select %p41, 0, %s40
      %s43 = ssub.s32 %s30, %s42
      %s44 = ssub.s32 %s31, %s38
      %s45 = sor.u32 %s43, %s44
      %p46 = scmp.eq.s32.totalorder %s45, 0
      %s48 = sadd.s32 %s47, 1
      %s49 = scalar_select %p46, %s47, %s48
      %p52 = pneg %p46
      %p53 = scmp.eq.s32.totalorder %s23, 1
      %p54 = por %p52, %p53
      %p55 = scmp.ne.s32.totalorder %s47, %s50
      %p56 = scmp.eq.s32.totalorder %s23, 0
      %p57 = por %p55, %p56
      %p58 = scmp.ne.s32.totalorder %s47, %s50
      %p59 = scmp.eq.s32.totalorder %s28, 1
      %p60 = por %p58, %p59
      %p61 = scmp.ne.s32.totalorder %s50, %s51
      %p62 = scmp.eq.s32.totalorder %s28, 0
      %p63 = por %p61, %p62
      %p64 = scmp.ne.s32.totalorder %s50, %s51
      %p65 = scmp.eq.s32.totalorder %s29, 1
      %p66 = por %p64, %p65
      %p68 = scmp.ne.s32.totalorder %s51, %s67
      %p69 = scmp.eq.s32.totalorder %s29, 0
      %p70 = por %p68, %p69
      %s71 = ssub.s32 %s30, %s42
      %p72 = scmp.eq.s32.totalorder %s71, 0
      %s74 = sadd.s32 %s73, 1
      %s75 = scalar_select %p72, %s73, %s74
      %p78 = pneg %p72
      %p79 = scmp.eq.s32.totalorder %s23, 1
      %p80 = por %p78, %p79
      %p81 = scmp.ne.s32.totalorder %s73, %s76
      %p82 = scmp.eq.s32.totalorder %s23, 0
      %p83 = por %p81, %p82
      %p84 = scmp.ne.s32.totalorder %s73, %s76
      %p85 = scmp.eq.s32.totalorder %s28, 1
      %p86 = por %p84, %p85
      %p87 = scmp.ne.s32.totalorder %s76, %s77
      %p88 = scmp.eq.s32.totalorder %s28, 0
      %p89 = por %p87, %p88
      %p90 = scmp.ne.s32.totalorder %s76, %s77
      %p91 = scmp.eq.s32.totalorder %s29, 1
      %p92 = por %p90, %p91
      %p94 = scmp.ne.s32.totalorder %s77, %s93
      %p95 = scmp.eq.s32.totalorder %s29, 0
      %p96 = por %p94, %p95
      %s97 = ssub.s32 %s30, %s42
      %p98 = scmp.eq.s32.totalorder %s97, 0
      %s100 = sadd.s32 %s99, 1
      %s101 = scalar_select %p98, %s99, %s100
      %p104 = pneg %p98
      %p105 = scmp.eq.s32.totalorder %s23, 1
      %p106 = por %p104, %p105
      %p107 = scmp.ne.s32.totalorder %s99, %s102
      %p108 = scmp.eq.s32.totalorder %s23, 0
      %p109 = por %p107, %p108
      %p110 = scmp.ne.s32.totalorder %s99, %s102
      %p111 = scmp.eq.s32.totalorder %s28, 1
      %p112 = por %p110, %p111
      %p113 = scmp.ne.s32.totalorder %s102, %s103
      %p114 = scmp.eq.s32.totalorder %s28, 0
      %p115 = por %p113, %p114
      %p116 = scmp.ne.s32.totalorder %s102, %s103
      %p117 = scmp.eq.s32.totalorder %s29, 1
      %p118 = por %p116, %p117
      %p120 = scmp.ne.s32.totalorder %s103, %s119
      %p121 = scmp.eq.s32.totalorder %s29, 0
      %p122 = por %p120, %p121
      %s124 = sadd.s32 %s123, 1
      %p127 = scmp.eq.s32.totalorder %s23, 1
      %p128 = scmp.ne.s32.totalorder %s123, %s125
      %p129 = scmp.eq.s32.totalorder %s23, 0
      %p130 = por %p128, %p129
      %p131 = scmp.ne.s32.totalorder %s123, %s125
      %p132 = scmp.eq.s32.totalorder %s28, 1
      %p133 = por %p131, %p132
      %p134 = scmp.ne.s32.totalorder %s125, %s126
      %p135 = scmp.eq.s32.totalorder %s28, 0
      %p136 = por %p134, %p135
      %p137 = scmp.ne.s32.totalorder %s125, %s126
      %p138 = scmp.eq.s32.totalorder %s29, 1
      %p139 = por %p137, %p138
      %p141 = scmp.ne.s32.totalorder %s126, %s140
      %p142 = scmp.eq.s32.totalorder %s29, 0
      %p143 = por %p141, %p142
      %s145 = sadd.s32 %s144, 1
      %p148 = scmp.eq.s32.totalorder %s23, 1
      %p149 = scmp.ne.s32.totalorder %s144, %s146
      %p150 = scmp.eq.s32.totalorder %s23, 0
      %p151 = por %p149, %p150
      %p152 = scmp.ne.s32.totalorder %s144, %s146
      %p153 = scmp.eq.s32.totalorder %s28, 1
      %p154 = por %p152, %p153
      %p155 = scmp.ne.s32.totalorder %s146, %s147
      %p156 = scmp.eq.s32.totalorder %s28, 0
      %p157 = por %p155, %p156
      %p158 = scmp.ne.s32.totalorder %s146, %s147
      %p159 = scmp.eq.s32.totalorder %s29, 1
      %p160 = por %p158, %p159
      %p162 = scmp.ne.s32.totalorder %s147, %s161
      %p163 = scmp.eq.s32.totalorder %s29, 0
      %p164 = por %p162, %p163
      %s166 = sadd.s32 %s165, 1
      %p169 = scmp.eq.s32.totalorder %s23, 1
      %p170 = scmp.ne.s32.totalorder %s165, %s167
      %p171 = scmp.eq.s32.totalorder %s23, 0
      %p172 = por %p170, %p171
      %p173 = scmp.ne.s32.totalorder %s165, %s167
      %p174 = scmp.eq.s32.totalorder %s28, 1
      %p175 = por %p173, %p174
      %p176 = scmp.ne.s32.totalorder %s167, %s168
      %p177 = scmp.eq.s32.totalorder %s28, 0
      %p178 = por %p176, %p177
      %p179 = scmp.ne.s32.totalorder %s167, %s168
      %p180 = scmp.eq.s32.totalorder %s29, 1
      %p181 = por %p179, %p180
      %p183 = scmp.ne.s32.totalorder %s168, %s182
      %p184 = scmp.eq.s32.totalorder %s29, 0
      %p185 = por %p183, %p184
      %s187 = sadd.s32 %s186, 1
      %p190 = scmp.eq.s32.totalorder %s23, 1
      %p191 = scmp.ne.s32.totalorder %s186, %s188
      %p192 = scmp.eq.s32.totalorder %s23, 0
      %p193 = por %p191, %p192
      %p194 = scmp.ne.s32.totalorder %s186, %s188
      %p195 = scmp.eq.s32.totalorder %s28, 1
      %p196 = por %p194, %p195
      %p197 = scmp.ne.s32.totalorder %s188, %s189
      %p198 = scmp.eq.s32.totalorder %s28, 0
      %p199 = por %p197, %p198
      %p200 = scmp.ne.s32.totalorder %s188, %s189
      %p201 = scmp.eq.s32.totalorder %s29, 1
      %p202 = por %p200, %p201
      %p204 = scmp.ne.s32.totalorder %s189, %s203
      %p205 = scmp.eq.s32.totalorder %s29, 0
      %p206 = por %p204, %p205
      %s207 = ssub.s32 %s30, %s42
      %s208 = ssub.s32 %s31, %s38
      %s209 = sor.u32 %s207, %s208
      %p210 = scmp.eq.s32.totalorder %s209, 0
      %s212 = sadd.s32 %s211, 1
      %s213 = scalar_select %p210, %s211, %s212
      %p216 = pneg %p210
      %p217 = scmp.eq.s32.totalorder %s23, 1
      %p218 = por %p216, %p217
      %p219 = scmp.ne.s32.totalorder %s211, %s214
      %p220 = scmp.eq.s32.totalorder %s23, 0
      %p221 = por %p219, %p220
      %p222 = scmp.ne.s32.totalorder %s211, %s214
      %p223 = scmp.eq.s32.totalorder %s28, 1
      %p224 = por %p222, %p223
      %p225 = scmp.ne.s32.totalorder %s214, %s215
      %p226 = scmp.eq.s32.totalorder %s28, 0
      %p227 = por %p225, %p226
      %p228 = scmp.ne.s32.totalorder %s214, %s215
      %p229 = scmp.eq.s32.totalorder %s29, 1
      %p230 = por %p228, %p229
      %p232 = scmp.ne.s32.totalorder %s215, %s231
      %p233 = scmp.eq.s32.totalorder %s29, 0
      %p234 = por %p232, %p233
      %p235 = scmp.le.s32.totalorder 1, %s23
      %p236 = scmp.lt.s32.totalorder %s23, 3
      %p237 = pnand %p235, %p236
      %p238 = pneg %p237
      // Predicated region
      $region9: #{tpu_custom_call.1} parent=5 // pred_check
        _
      $region10: #{tpu_custom_call.1} parent=5 // pred_check_branch
        %240 = sbr.rel (%p237) target = $region12
      $region11: #{tpu_custom_call.1} parent=5 // pred_region
        %s241 = ssub.s32 %s23, 1
        // Predicated region
        $region13: #{tpu_custom_call.1} parent=11 // pred_check
          %p242 = pneg %p136
        $region14: #{tpu_custom_call.1} parent=11 // pred_check_branch
          %244 = sbr.rel (%p242) target = $region16
        $region15: #{tpu_custom_call.1} parent=11 // pred_region
          %s246 = ssub.s32 768, 768
          %247 = vsyncadd [#allocation10], %s246
          %s248 = sshll.u32 [#allocation9], 4
          %s249 = int_to_ptr.vmem [resolvable:$true] %s248
          %254 = dma.hbm_to_vmem [thread:$0]  %s3, 768, %s249, [#allocation10], 64, 64, 4
        $region16: #{tpu_custom_call.1} parent=11 // pred_fallthru
          _
        // Predicated region
        $region17: #{tpu_custom_call.1} parent=11 // pred_check
          %p255 = pneg %p157
        $region18: #{tpu_custom_call.1} parent=11 // pred_check_branch
          %257 = sbr.rel (%p255) target = $region20
        $region19: #{tpu_custom_call.1} parent=11 // pred_region
          %s259 = ssub.s32 48, 48
          %260 = vsyncadd [#allocation10], %s259
          %s261 = sshll.u32 [#allocation11], 4
          %s262 = int_to_ptr.vmem [resolvable:$true] %s261
          %267 = dma.hbm_to_vmem [thread:$0]  %s4, 48, %s262, [#allocation10], 16, 16, 1
        $region20: #{tpu_custom_call.1} parent=11 // pred_fallthru
          _
        // Predicated region
        $region21: #{tpu_custom_call.1} parent=11 // pred_check
          %p268 = pneg %p178
        $region22: #{tpu_custom_call.1} parent=11 // pred_check_branch
          %270 = sbr.rel (%p268) target = $region24
        $region23: #{tpu_custom_call.1} parent=11 // pred_region
          _
        $region24: #{tpu_custom_call.1} parent=11 // pred_fallthru
          _
        // Predicated region
        $region25: #{tpu_custom_call.1} parent=11 // pred_check
          %p271 = pneg %p199
        $region26: #{tpu_custom_call.1} parent=11 // pred_check_branch
          %273 = sbr.rel (%p271) target = $region28
        $region27: #{tpu_custom_call.1} parent=11 // pred_region
          _
        $region28: #{tpu_custom_call.1} parent=11 // pred_fallthru
          _
      $region12: #{tpu_custom_call.1} parent=5 // pred_fallthru
        _
      %p274 = scmp.lt.s32.totalorder %s23, 2
      // Predicated region
      $region29: #{tpu_custom_call.1} parent=5 // pred_check
        %p275 = pneg %p274
      $region30: #{tpu_custom_call.1} parent=5 // pred_check_branch
        %277 = sbr.rel (%p275) target = $region32
      $region31: #{tpu_custom_call.1} parent=5 // pred_region
        // Predicated region
        $region33: #{tpu_custom_call.1} parent=31 // pred_check
          %p278 = pneg %p57
        $region34: #{tpu_custom_call.1} parent=31 // pred_check_branch
          %280 = sbr.rel (%p278) target = $region36
        $region35: #{tpu_custom_call.1} parent=31 // pred_region
          %s281 = sand.u32 %s47, 1
          %s282 = scalar_lea.sflag [#allocation4], %s281
          %s283 = sand.u32 %s47, 1
          %s284 = smul.addr %s283, 8
          %s285 = scalar_lea.vmem [#allocation3], %s284
          %s287 = ssub.s32 128, 128
          %288 = vsyncadd %s282, %s287
          %s289 = sadd.s32 %s31, %s30
          %s290 = smul.addr %s289, 128
          %s291 = scalar_lea.hbm %s0, %s290
          %s293 = sshll.u32 %s285, 4
          %s294 = int_to_ptr.vmem [resolvable:$true] %s293
          %296 = dma.hbm_to_vmem [thread:$0]  %s291, 128, %s294, %s282
        $region36: #{tpu_custom_call.1} parent=31 // pred_fallthru
          _
        // Predicated region
        $region37: #{tpu_custom_call.1} parent=31 // pred_check
          %p297 = pneg %p83
        $region38: #{tpu_custom_call.1} parent=31 // pred_check_branch
          %299 = sbr.rel (%p297) target = $region40
        $region39: #{tpu_custom_call.1} parent=31 // pred_region
          %s300 = sand.u32 %s23, 1
          %s301 = scalar_lea.sflag [#allocation7], %s300
          %s302 = sand.u32 %s73, 1
          %s303 = smul.addr %s302, 8
          %s304 = scalar_lea.vmem [#allocation6], %s303
          %s306 = ssub.s32 128, 128
          %307 = vsyncadd %s301, %s306
          %s308 = smul.addr %s30, 128
          %s309 = scalar_lea.hbm %s1, %s308
          %s311 = sshll.u32 %s304, 4
          %s312 = int_to_ptr.vmem [resolvable:$true] %s311
          %314 = dma.hbm_to_vmem [thread:$0]  %s309, 128, %s312, %s301
        $region40: #{tpu_custom_call.1} parent=31 // pred_fallthru
          _
        // Predicated region
        $region41: #{tpu_custom_call.1} parent=31 // pred_check
          %p315 = pneg %p109
        $region42: #{tpu_custom_call.1} parent=31 // pred_check_branch
          %317 = sbr.rel (%p315) target = $region44
        $region43: #{tpu_custom_call.1} parent=31 // pred_region
          %s318 = sand.u32 %s23, 1
          %s319 = scalar_lea.sflag [#allocation7], %s318
          %s320 = sand.u32 %s99, 1
          %s321 = smul.addr %s320, 8
          %s322 = scalar_lea.vmem [#allocation8], %s321
          %s324 = ssub.s32 128, 128
          %325 = vsyncadd %s319, %s324
          %s326 = smul.addr %s30, 128
          %s327 = scalar_lea.hbm %s2, %s326
          %s329 = sshll.u32 %s322, 4
          %s330 = int_to_ptr.vmem [resolvable:$true] %s329
          %332 = dma.hbm_to_vmem [thread:$0]  %s327, 128, %s330, %s319
        $region44: #{tpu_custom_call.1} parent=31 // pred_fallthru
          _
      $region32: #{tpu_custom_call.1} parent=5 // pred_fallthru
        _
      %p333 = scmp.le.s32.totalorder 1, %s23
      %p334 = scmp.lt.s32.totalorder %s23, 3
      %p335 = pnand %p333, %p334
      %p336 = pneg %p335
      // Predicated region
      $region45: #{tpu_custom_call.1} parent=5 // pred_check
        _
      $region46: #{tpu_custom_call.1} parent=5 // pred_check_branch
        %338 = sbr.rel (%p335) target = $region48
      $region47: #{tpu_custom_call.1} parent=5 // pred_region
        %s339 = ssub.s32 %s23, 1
        %s340 = sand.u32 %s50, 1
        %s341 = scalar_lea.sflag [#allocation4], %s340
        %s342 = sand.u32 %s50, 1
        %s343 = smul.addr %s342, 8
        %s344 = scalar_lea.vmem [#allocation3], %s343
        // Predicated region
        $region49: #{tpu_custom_call.1} parent=47 // pred_check
          %p345 = pneg %p63
        $region50: #{tpu_custom_call.1} parent=47 // pred_check_branch
          %347 = sbr.rel (%p345) target = $region52
        $region51: #{tpu_custom_call.1} parent=47 // pred_region
          %348 = dma.done %s341, 128
        $region52: #{tpu_custom_call.1} parent=47 // pred_fallthru
          _
        %s349 = sand.u32 %s28, 1
        %s350 = scalar_lea.sflag [#allocation7], %s349
        %s351 = sand.u32 %s76, 1
        %s352 = smul.addr %s351, 8
        %s353 = scalar_lea.vmem [#allocation6], %s352
        // Predicated region
        $region53: #{tpu_custom_call.1} parent=47 // pred_check
          %p354 = pneg %p89
        $region54: #{tpu_custom_call.1} parent=47 // pred_check_branch
          %356 = sbr.rel (%p354) target = $region56
        $region55: #{tpu_custom_call.1} parent=47 // pred_region
          %357 = dma.done %s350, 128
        $region56: #{tpu_custom_call.1} parent=47 // pred_fallthru
          _
        %s358 = sand.u32 %s28, 1
        %s359 = scalar_lea.sflag [#allocation7], %s358
        %s360 = sand.u32 %s102, 1
        %s361 = smul.addr %s360, 8
        %s362 = scalar_lea.vmem [#allocation8], %s361
        // Predicated region
        $region57: #{tpu_custom_call.1} parent=47 // pred_check
          %p363 = pneg %p115
        $region58: #{tpu_custom_call.1} parent=47 // pred_check_branch
          %365 = sbr.rel (%p363) target = $region60
        $region59: #{tpu_custom_call.1} parent=47 // pred_region
          %366 = dma.done %s359, 128
        $region60: #{tpu_custom_call.1} parent=47 // pred_fallthru
          _
        // Predicated region
        $region61: #{tpu_custom_call.1} parent=47 // pred_check
          %p367 = pneg %p136
        $region62: #{tpu_custom_call.1} parent=47 // pred_check_branch
          %369 = sbr.rel (%p367) target = $region64
        $region63: #{tpu_custom_call.1} parent=47 // pred_region
          %370 = dma.done [#allocation10], 768
        $region64: #{tpu_custom_call.1} parent=47 // pred_fallthru
          _
        // Predicated region
        $region65: #{tpu_custom_call.1} parent=47 // pred_check
          %p371 = pneg %p157
        $region66: #{tpu_custom_call.1} parent=47 // pred_check_branch
          %373 = sbr.rel (%p371) target = $region68
        $region67: #{tpu_custom_call.1} parent=47 // pred_region
          %374 = dma.done [#allocation10], 48
        $region68: #{tpu_custom_call.1} parent=47 // pred_fallthru
          _
        %s375 = sand.u32 %s50, 1
        %s376 = scalar_lea.sflag [#allocation4], %s375
        %s377 = sand.u32 %s50, 1
        %s378 = smul.addr %s377, 8
        %s379 = scalar_lea.vmem [#allocation3], %s378
        %p380 = pneg %p63
        %p381 = pneg %p60
        %s382 = sand.u32 %s28, 1
        %s383 = scalar_lea.sflag [#allocation7], %s382
        %s384 = sand.u32 %s76, 1
        %s385 = smul.addr %s384, 8
        %s386 = scalar_lea.vmem [#allocation6], %s385
        %p387 = pneg %p89
        %p388 = pneg %p86
        %s389 = sand.u32 %s28, 1
        %s390 = scalar_lea.sflag [#allocation7], %s389
        %s391 = sand.u32 %s102, 1
        %s392 = smul.addr %s391, 8
        %s393 = scalar_lea.vmem [#allocation8], %s392
        %p394 = pneg %p115
        %p395 = pneg %p112
        %p396 = pneg %p136
        %p397 = pneg %p133
        %p398 = pneg %p157
        %p399 = pneg %p154
        %p400 = pneg %p178
        %p401 = pneg %p175
        %p402 = pneg %p199
        %p403 = pneg %p196
        %p404 = pneg %p227
        %p405 = pneg %p224
        %s406 = sand.u32 %s214, 1
        %s407 = scalar_lea.sflag [#allocation5], %s406
        %s408 = sand.u32 %s214, 1
        %s409 = smul.addr %s408, 8
        %s410 = scalar_lea.vmem [#allocation12], %s409
        %v412 = vld [vmem:[#allocation9] sm:$0xf]
        %v413 = vld [vmem:[#allocation9 + $0x4] sm:$0xf]
        %v414 = vld [vmem:[#allocation9 + $0x8] sm:$0xf]
        %v415 = vld [vmem:[#allocation9 + $0xc] sm:$0xf]
        %s416 = scalar_lea.vmem [#allocation9], 16
        %v417 = vld [vmem:[%s416] sm:$0xf]
        %v418 = vld [vmem:[%s416 + $0x4] sm:$0xf]
        %v419 = vld [vmem:[%s416 + $0x8] sm:$0xf]
        %v420 = vld [vmem:[%s416 + $0xc] sm:$0xf]
        %s421 = scalar_lea.vmem [#allocation9], 32
        %v422 = vld [vmem:[%s421] sm:$0xf]
        %v423 = vld [vmem:[%s421 + $0x4] sm:$0xf]
        %v424 = vld [vmem:[%s421 + $0x8] sm:$0xf]
        %v425 = vld [vmem:[%s421 + $0xc] sm:$0xf]
        %v426 = vld [vmem:[%s5] sm:$0xf]
        %v427 = vld [vmem:[%s5 + $0x4] sm:$0xf]
        %v428 = vld [vmem:[%s5 + $0x8] sm:$0xf]
        %v429 = vld [vmem:[%s5 + $0xc] sm:$0xf]
        %v430 = vld [vmem:[#allocation11] sm:$0x1]
        %s431 = scalar_lea.vmem [#allocation11], 1
        %v432 = vld [vmem:[%s431] sm:$0x1]
        %s433 = scalar_lea.vmem [#allocation11], 2
        %v434 = vld [vmem:[%s433] sm:$0x1]
        %v435 = vld [vmem:[%s6] sm:$0x1]
        %v436 = vld [vmem:[%s344] sm:$0xff]
        %v437 = vpack.c.bf16 %v436, %v436
        %v438 = vld [vmem:[%s353] sm:$0xff]
        %v439 = vpack.c.bf16 %v438, %v438
        %v440 = vld [vmem:[%s362] sm:$0xff]
        %v441 = vpack.c.bf16 %v440, %v440
        %v443 = vlaneseq
        %v444 = vshrl.u32 %v443, 7
        %v445 = vsub.s32 0, %v444
        %v446 = vrot.slane %v430, %v445
        %v452 = vunpack.c.l.b16 %v412
        %v453 = vunpack.c.l.b16 %v413
        %v454 = vunpack.c.l.b16 %v414
        %v455 = vunpack.c.l.b16 %v415
        %v456 = vpack.c.b16 %v453, %v452
        %v457 = vpack.c.b16 %v455, %v454
        %vm460 = vcmask 261120
        %v462 = vsel %vm460, %v437, 0
        %464 = vmatprep.subr.bf16.mxu0 0
        %465 = vmatpush1.bf16.msra.mxu0 %v456
        %466 = vmatprep.subr.bf16.mxu0 0
        %467 = vmatpush1.bf16.msra.mxu0 %v457
        %468 = vmatprep.subr.bf16.mxu0 0
        %469 = vmatpush1.bf16.msra.mxu0 0
        %470 = vmatprep.subr.bf16.mxu0 0
        %471 = vmatpush1.bf16.msra.mxu0 0
        %472 = vmatprep.subr.bf16.mxu0 0
        %473 = vmatpush1.bf16.msra.mxu0 0
        %474 = vmatprep.subr.bf16.mxu0 0
        %475 = vmatpush1.bf16.msra.mxu0 0
        %476 = vmatprep.subr.bf16.mxu0 0
        %477 = vmatpush1.bf16.msra.mxu0 0
        %478 = vmatprep.subr.bf16.mxu0 0
        %479 = vmatpush1.bf16.msra.mxu0 0
        %480 = vmatprep.subr.bf16.mxu0 0
        %481 = vmatpush1.bf16.msra.mxu0 0
        %482 = vmatprep.subr.bf16.mxu0 0
        %483 = vmatpush1.bf16.msra.mxu0 0
        %484 = vmatprep.subr.bf16.mxu0 0
        %485 = vmatpush1.bf16.msra.mxu0 0
        %486 = vmatprep.subr.bf16.mxu0 0
        %487 = vmatpush1.bf16.msra.mxu0 0
        %488 = vmatprep.subr.bf16.mxu0 0
        %489 = vmatpush1.bf16.msra.mxu0 0
        %490 = vmatprep.subr.bf16.mxu0 0
        %491 = vmatpush1.bf16.msra.mxu0 0
        %492 = vmatprep.subr.bf16.mxu0 0
        %493 = vmatpush1.bf16.msra.mxu0 0
        %494 = vmatprep.subr.bf16.mxu0 0
        %495 = vmatpush1.bf16.msra.mxu0 0
        %496 = vmatprep.mubr.bf16.mxu0 0
        %497 = vmatmul.mubr.bf16.gmra.mrb[0].mxu0 %v462
        %v498 = vpop.f32.mrb[0].mxu0
        %v499 = vadd.f32 %v446, %v498
        %v500 = vpop.f32.mrb[0].mxu0
        %v501 = vpop.f32.mrb[0].mxu0
        %v502 = vpop.f32.mrb[0].mxu0
        %503 = vdwg.mxu0
        %v504 = vpack.c.bf16 %v499, %v499
        %v506 = vlaneseq
        %v507 = vshrl.u32 %v506, 7
        %v508 = vsub.s32 0, %v507
        %v509 = vrot.slane %v432, %v508
        %v515 = vunpack.c.l.b16 %v417
        %v516 = vunpack.c.l.b16 %v418
        %v517 = vunpack.c.l.b16 %v419
        %v518 = vunpack.c.l.b16 %v420
        %v519 = vpack.c.b16 %v516, %v515
        %v520 = vpack.c.b16 %v518, %v517
        %v524 = vsel %vm460, %v439, 0
        %526 = vmatprep.subr.bf16.mxu0 0
        %527 = vmatpush1.bf16.msra.mxu0 %v519
        %528 = vmatprep.subr.bf16.mxu0 0
        %529 = vmatpush1.bf16.msra.mxu0 %v520
        %530 = vmatprep.subr.bf16.mxu0 0
        %531 = vmatpush1.bf16.msra.mxu0 0
        %532 = vmatprep.subr.bf16.mxu0 0
        %533 = vmatpush1.bf16.msra.mxu0 0
        %534 = vmatprep.subr.bf16.mxu0 0
        %535 = vmatpush1.bf16.msra.mxu0 0
        %536 = vmatprep.subr.bf16.mxu0 0
        %537 = vmatpush1.bf16.msra.mxu0 0
        %538 = vmatprep.subr.bf16.mxu0 0
        %539 = vmatpush1.bf16.msra.mxu0 0
        %540 = vmatprep.subr.bf16.mxu0 0
        %541 = vmatpush1.bf16.msra.mxu0 0
        %542 = vmatprep.subr.bf16.mxu0 0
        %543 = vmatpush1.bf16.msra.mxu0 0
        %544 = vmatprep.subr.bf16.mxu0 0
        %545 = vmatpush1.bf16.msra.mxu0 0
        %546 = vmatprep.subr.bf16.mxu0 0
        %547 = vmatpush1.bf16.msra.mxu0 0
        %548 = vmatprep.subr.bf16.mxu0 0
        %549 = vmatpush1.bf16.msra.mxu0 0
        %550 = vmatprep.subr.bf16.mxu0 0
        %551 = vmatpush1.bf16.msra.mxu0 0
        %552 = vmatprep.subr.bf16.mxu0 0
        %553 = vmatpush1.bf16.msra.mxu0 0
        %554 = vmatprep.subr.bf16.mxu0 0
        %555 = vmatpush1.bf16.msra.mxu0 0
        %556 = vmatprep.subr.bf16.mxu0 0
        %557 = vmatpush1.bf16.msra.mxu0 0
        %558 = vmatprep.mubr.bf16.mxu0 0
        %559 = vmatmul.mubr.bf16.gmra.mrb[0].mxu0 %v524
        %v560 = vpop.f32.mrb[0].mxu0
        %v561 = vadd.f32 %v509, %v560
        %v562 = vpop.f32.mrb[0].mxu0
        %v563 = vpop.f32.mrb[0].mxu0
        %v564 = vpop.f32.mrb[0].mxu0
        %565 = vdwg.mxu0
        %v566 = vpack.c.bf16 %v561, %v561
        %v568 = vlaneseq
        %v569 = vshrl.u32 %v568, 7
        %v570 = vsub.s32 0, %v569
        %v571 = vrot.slane %v434, %v570
        %v577 = vunpack.c.l.b16 %v422
        %v578 = vunpack.c.l.b16 %v423
        %v579 = vunpack.c.l.b16 %v424
        %v580 = vunpack.c.l.b16 %v425
        %v581 = vpack.c.b16 %v578, %v577
        %v582 = vpack.c.b16 %v580, %v579
        %v586 = vsel %vm460, %v441, 0
        %588 = vmatprep.subr.bf16.mxu0 0
        %589 = vmatpush1.bf16.msra.mxu0 %v581
        %590 = vmatprep.subr.bf16.mxu0 0
        %591 = vmatpush1.bf16.msra.mxu0 %v582
        %592 = vmatprep.subr.bf16.mxu0 0
        %593 = vmatpush1.bf16.msra.mxu0 0
        %594 = vmatprep.subr.bf16.mxu0 0
        %595 = vmatpush1.bf16.msra.mxu0 0
        %596 = vmatprep.subr.bf16.mxu0 0
        %597 = vmatpush1.bf16.msra.mxu0 0
        %598 = vmatprep.subr.bf16.mxu0 0
        %599 = vmatpush1.bf16.msra.mxu0 0
        %600 = vmatprep.subr.bf16.mxu0 0
        %601 = vmatpush1.bf16.msra.mxu0 0
        %602 = vmatprep.subr.bf16.mxu0 0
        %603 = vmatpush1.bf16.msra.mxu0 0
        %604 = vmatprep.subr.bf16.mxu0 0
        %605 = vmatpush1.bf16.msra.mxu0 0
        %606 = vmatprep.subr.bf16.mxu0 0
        %607 = vmatpush1.bf16.msra.mxu0 0
        %608 = vmatprep.subr.bf16.mxu0 0
        %609 = vmatpush1.bf16.msra.mxu0 0
        %610 = vmatprep.subr.bf16.mxu0 0
        %611 = vmatpush1.bf16.msra.mxu0 0
        %612 = vmatprep.subr.bf16.mxu0 0
        %613 = vmatpush1.bf16.msra.mxu0 0
        %614 = vmatprep.subr.bf16.mxu0 0
        %615 = vmatpush1.bf16.msra.mxu0 0
        %616 = vmatprep.subr.bf16.mxu0 0
        %617 = vmatpush1.bf16.msra.mxu0 0
        %618 = vmatprep.subr.bf16.mxu0 0
        %619 = vmatpush1.bf16.msra.mxu0 0
        %620 = vmatprep.mubr.bf16.mxu0 0
        %621 = vmatmul.mubr.bf16.gmra.mrb[0].mxu0 %v586
        %v622 = vpop.f32.mrb[0].mxu0
        %v623 = vadd.f32 %v571, %v622
        %v624 = vpop.f32.mrb[0].mxu0
        %v625 = vpop.f32.mrb[0].mxu0
        %v626 = vpop.f32.mrb[0].mxu0
        %627 = vdwg.mxu0
        %v628 = vpack.c.bf16 %v623, %v623
        %vm629 = vcmask 64512
        %v631 = vsel %vm629, %v504, 0
        %v634 = vsel %vm629, %v566, 0
        %636 = vmatprep.subr.bf16.mxu0 0
        %637 = vmatpush1.bf16.xpose.msra.mxu0 %v634
        %638 = vmatprep.subr.bf16.mxu0 0
        %639 = vmatpush1.bf16.xpose.msra.mxu0 0
        %640 = vmatprep.subr.bf16.mxu0 0
        %641 = vmatpush1.bf16.xpose.msra.mxu0 0
        %642 = vmatprep.subr.bf16.mxu0 0
        %643 = vmatpush1.bf16.xpose.msra.mxu0 0
        %644 = vmatprep.subr.bf16.mxu0 0
        %645 = vmatpush1.bf16.xpose.msra.mxu0 0
        %646 = vmatprep.subr.bf16.mxu0 0
        %647 = vmatpush1.bf16.xpose.msra.mxu0 0
        %648 = vmatprep.subr.bf16.mxu0 0
        %649 = vmatpush1.bf16.xpose.msra.mxu0 0
        %650 = vmatprep.subr.bf16.mxu0 0
        %651 = vmatpush1.bf16.xpose.msra.mxu0 0
        %652 = vmatprep.subr.bf16.mxu0 0
        %653 = vmatpush1.bf16.xpose.msra.mxu0 0
        %654 = vmatprep.subr.bf16.mxu0 0
        %655 = vmatpush1.bf16.xpose.msra.mxu0 0
        %656 = vmatprep.subr.bf16.mxu0 0
        %657 = vmatpush1.bf16.xpose.msra.mxu0 0
        %658 = vmatprep.subr.bf16.mxu0 0
        %659 = vmatpush1.bf16.xpose.msra.mxu0 0
        %660 = vmatprep.subr.bf16.mxu0 0
        %661 = vmatpush1.bf16.xpose.msra.mxu0 0
        %662 = vmatprep.subr.bf16.mxu0 0
        %663 = vmatpush1.bf16.xpose.msra.mxu0 0
        %664 = vmatprep.subr.bf16.mxu0 0
        %665 = vmatpush1.bf16.xpose.msra.mxu0 0
        %666 = vmatprep.subr.bf16.mxu0 0
        %667 = vmatpush1.bf16.xpose.msra.mxu0 0
        %668 = vmatprep.mubr.bf16.mxu0 0
        %669 = vmatmul.mubr.bf16.gmra.mrb[0].mxu0 %v631
        %v670 = vpop.f32.mrb[0].mxu0
        %v671 = vadd.f32 0.0, %v670
        %v672 = vpop.f32.mrb[0].mxu0
        %v673 = vpop.f32.mrb[0].mxu0
        %v674 = vpop.f32.mrb[0].mxu0
        %675 = vdwg.mxu0
        %v676 = vsel %vm629, %v671, -inf
        %677 = vmax.xlane.f32.xlu0 %v676
        %v678 = vpop.xlane.xlu0 %677
        %v679 = vsub.f32 %v671, %v678
        %v680 = vmul.f32 %v679, 1.442695
        %v681 = vpow.pop %v680
        %v682 = vsel %vm629, %v681, 0.0
        %683 = vadd.xlane.f32.xlu0 %v682
        %v684 = vpop.xlane.xlu0 %683
        %v685 = vrcp.pop %v684
        %v686 = vmul.f32 %v681, %v685
        %v687 = vpack.c.bf16 %v686, %v686
        %v689 = vsel %vm629, %v687, 0
        %vm691 = vcmask 1043456
        %v693 = vsel %vm691, %v628, 0
        %695 = vmatprep.subr.bf16.mxu0 0
        %696 = vmatpush1.bf16.msra.mxu0 %v693
        %697 = vmatprep.subr.bf16.mxu0 0
        %698 = vmatpush1.bf16.msra.mxu0 0
        %699 = vmatprep.subr.bf16.mxu0 0
        %700 = vmatpush1.bf16.msra.mxu0 0
        %701 = vmatprep.subr.bf16.mxu0 0
        %702 = vmatpush1.bf16.msra.mxu0 0
        %703 = vmatprep.subr.bf16.mxu0 0
        %704 = vmatpush1.bf16.msra.mxu0 0
        %705 = vmatprep.subr.bf16.mxu0 0
        %706 = vmatpush1.bf16.msra.mxu0 0
        %707 = vmatprep.subr.bf16.mxu0 0
        %708 = vmatpush1.bf16.msra.mxu0 0
        %709 = vmatprep.subr.bf16.mxu0 0
        %710 = vmatpush1.bf16.msra.mxu0 0
        %711 = vmatprep.subr.bf16.mxu0 0
        %712 = vmatpush1.bf16.msra.mxu0 0
        %713 = vmatprep.subr.bf16.mxu0 0
        %714 = vmatpush1.bf16.msra.mxu0 0
        %715 = vmatprep.subr.bf16.mxu0 0
        %716 = vmatpush1.bf16.msra.mxu0 0
        %717 = vmatprep.subr.bf16.mxu0 0
        %718 = vmatpush1.bf16.msra.mxu0 0
        %719 = vmatprep.subr.bf16.mxu0 0
        %720 = vmatpush1.bf16.msra.mxu0 0
        %721 = vmatprep.subr.bf16.mxu0 0
        %722 = vmatpush1.bf16.msra.mxu0 0
        %723 = vmatprep.subr.bf16.mxu0 0
        %724 = vmatpush1.bf16.msra.mxu0 0
        %725 = vmatprep.subr.bf16.mxu0 0
        %726 = vmatpush1.bf16.msra.mxu0 0
        %727 = vmatprep.mubr.bf16.mxu0 0
        %728 = vmatmul.mubr.bf16.gmra.mrb[0].mxu0 %v689
        %v729 = vpop.f32.mrb[0].mxu0
        %v730 = vadd.f32 0.0, %v729
        %v731 = vpop.f32.mrb[0].mxu0
        %v732 = vpop.f32.mrb[0].mxu0
        %v733 = vpop.f32.mrb[0].mxu0
        %734 = vdwg.mxu0
        %v735 = vpack.c.bf16 %v730, %v730
        %vm736 = vcmask 60416
        %737 = vst.msk [vmem:[#allocation2] sm:$0xf] %vm736, %v735
        %739 = vrot.lane.b32.xlu0 %v504, 120
        %v740 = vpop.permute.xlu0 %739
        %742 = vrot.lane.b32.xlu0 %v566, 120
        %v743 = vpop.permute.xlu0 %742
        %v745 = vsel %vm629, %v740, 0
        %v748 = vsel %vm629, %v743, 0
        %750 = vmatprep.subr.bf16.mxu0 0
        %751 = vmatpush1.bf16.xpose.msra.mxu0 %v748
        %752 = vmatprep.subr.bf16.mxu0 0
        %753 = vmatpush1.bf16.xpose.msra.mxu0 0
        %754 = vmatprep.subr.bf16.mxu0 0
        %755 = vmatpush1.bf16.xpose.msra.mxu0 0
        %756 = vmatprep.subr.bf16.mxu0 0
        %757 = vmatpush1.bf16.xpose.msra.mxu0 0
        %758 = vmatprep.subr.bf16.mxu0 0
        %759 = vmatpush1.bf16.xpose.msra.mxu0 0
        %760 = vmatprep.subr.bf16.mxu0 0
        %761 = vmatpush1.bf16.xpose.msra.mxu0 0
        %762 = vmatprep.subr.bf16.mxu0 0
        %763 = vmatpush1.bf16.xpose.msra.mxu0 0
        %764 = vmatprep.subr.bf16.mxu0 0
        %765 = vmatpush1.bf16.xpose.msra.mxu0 0
        %766 = vmatprep.subr.bf16.mxu0 0
        %767 = vmatpush1.bf16.xpose.msra.mxu0 0
        %768 = vmatprep.subr.bf16.mxu0 0
        %769 = vmatpush1.bf16.xpose.msra.mxu0 0
        %770 = vmatprep.subr.bf16.mxu0 0
        %771 = vmatpush1.bf16.xpose.msra.mxu0 0
        %772 = vmatprep.subr.bf16.mxu0 0
        %773 = vmatpush1.bf16.xpose.msra.mxu0 0
        %774 = vmatprep.subr.bf16.mxu0 0
        %775 = vmatpush1.bf16.xpose.msra.mxu0 0
        %776 = vmatprep.subr.bf16.mxu0 0
        %777 = vmatpush1.bf16.xpose.msra.mxu0 0
        %778 = vmatprep.subr.bf16.mxu0 0
        %779 = vmatpush1.bf16.xpose.msra.mxu0 0
        %780 = vmatprep.subr.bf16.mxu0 0
        %781 = vmatpush1.bf16.xpose.msra.mxu0 0
        %782 = vmatprep.mubr.bf16.mxu0 0
        %783 = vmatmul.mubr.bf16.gmra.mrb[0].mxu0 %v745
        %v784 = vpop.f32.mrb[0].mxu0
        %v785 = vadd.f32 0.0, %v784
        %v786 = vpop.f32.mrb[0].mxu0
        %v787 = vpop.f32.mrb[0].mxu0
        %v788 = vpop.f32.mrb[0].mxu0
        %789 = vdwg.mxu0
        %v790 = vsel %vm629, %v785, -inf
        %791 = vmax.xlane.f32.xlu0 %v790
        %v792 = vpop.xlane.xlu0 %791
        %v793 = vsub.f32 %v785, %v792
        %v794 = vmul.f32 %v793, 1.442695
        %v795 = vpow.pop %v794
        %v796 = vsel %vm629, %v795, 0.0
        %797 = vadd.xlane.f32.xlu0 %v796
        %v798 = vpop.xlane.xlu0 %797
        %v799 = vrcp.pop %v798
        %v800 = vmul.f32 %v795, %v799
        %v801 = vpack.c.bf16 %v800, %v800
        %803 = vrot.lane.b32.xlu0 %v628, 120
        %v804 = vpop.permute.xlu0 %803
        %v806 = vsel %vm629, %v801, 0
        %v809 = vsel %vm691, %v804, 0
        %811 = vmatprep.subr.bf16.mxu0 0
        %812 = vmatpush1.bf16.msra.mxu0 %v809
        %813 = vmatprep.subr.bf16.mxu0 0
        %814 = vmatpush1.bf16.msra.mxu0 0
        %815 = vmatprep.subr.bf16.mxu0 0
        %816 = vmatpush1.bf16.msra.mxu0 0
        %817 = vmatprep.subr.bf16.mxu0 0
        %818 = vmatpush1.bf16.msra.mxu0 0
        %819 = vmatprep.subr.bf16.mxu0 0
        %820 = vmatpush1.bf16.msra.mxu0 0
        %821 = vmatprep.subr.bf16.mxu0 0
        %822 = vmatpush1.bf16.msra.mxu0 0
        %823 = vmatprep.subr.bf16.mxu0 0
        %824 = vmatpush1.bf16.msra.mxu0 0
        %825 = vmatprep.subr.bf16.mxu0 0
        %826 = vmatpush1.bf16.msra.mxu0 0
        %827 = vmatprep.subr.bf16.mxu0 0
        %828 = vmatpush1.bf16.msra.mxu0 0
        %829 = vmatprep.subr.bf16.mxu0 0
        %830 = vmatpush1.bf16.msra.mxu0 0
        %831 = vmatprep.subr.bf16.mxu0 0
        %832 = vmatpush1.bf16.msra.mxu0 0
        %833 = vmatprep.subr.bf16.mxu0 0
        %834 = vmatpush1.bf16.msra.mxu0 0
        %835 = vmatprep.subr.bf16.mxu0 0
        %836 = vmatpush1.bf16.msra.mxu0 0
        %837 = vmatprep.subr.bf16.mxu0 0
        %838 = vmatpush1.bf16.msra.mxu0 0
        %839 = vmatprep.subr.bf16.mxu0 0
        %840 = vmatpush1.bf16.msra.mxu0 0
        %841 = vmatprep.subr.bf16.mxu0 0
        %842 = vmatpush1.bf16.msra.mxu0 0
        %843 = vmatprep.mubr.bf16.mxu0 0
        %844 = vmatmul.mubr.bf16.gmra.mrb[0].mxu0 %v806
        %v845 = vpop.f32.mrb[0].mxu0
        %v846 = vadd.f32 0.0, %v845
        %v847 = vpop.f32.mrb[0].mxu0
        %v848 = vpop.f32.mrb[0].mxu0
        %v849 = vpop.f32.mrb[0].mxu0
        %850 = vdwg.mxu0
        %v851 = vpack.c.bf16 %v846, %v846
        %v853 = vunpack.c.l.b16 %v851
        %v854 = vpack.c.b16 %v853, %v853
        %855 = vrot.lane.b32.xlu0 %v854, 8
        %v856 = vpop.permute.xlu0 %855
        %vm858 = vcmask 126016
        %859 = vst.msk [vmem:[#allocation2] sm:$0xf] %vm858, %v856
        %860 = vrot.lane.b32.xlu0 %v504, 112
        %v861 = vpop.permute.xlu0 %860
        %862 = vrot.lane.b32.xlu0 %v566, 112
        %v863 = vpop.permute.xlu0 %862
        %v865 = vsel %vm629, %v861, 0
        %v868 = vsel %vm629, %v863, 0
        %870 = vmatprep.subr.bf16.mxu0 0
        %871 = vmatpush1.bf16.xpose.msra.mxu0 %v868
        %872 = vmatprep.subr.bf16.mxu0 0
        %873 = vmatpush1.bf16.xpose.msra.mxu0 0
        %874 = vmatprep.subr.bf16.mxu0 0
        %875 = vmatpush1.bf16.xpose.msra.mxu0 0
        %876 = vmatprep.subr.bf16.mxu0 0
        %877 = vmatpush1.bf16.xpose.msra.mxu0 0
        %878 = vmatprep.subr.bf16.mxu0 0
        %879 = vmatpush1.bf16.xpose.msra.mxu0 0
        %880 = vmatprep.subr.bf16.mxu0 0
        %881 = vmatpush1.bf16.xpose.msra.mxu0 0
        %882 = vmatprep.subr.bf16.mxu0 0
        %883 = vmatpush1.bf16.xpose.msra.mxu0 0
        %884 = vmatprep.subr.bf16.mxu0 0
        %885 = vmatpush1.bf16.xpose.msra.mxu0 0
        %886 = vmatprep.subr.bf16.mxu0 0
        %887 = vmatpush1.bf16.xpose.msra.mxu0 0
        %888 = vmatprep.subr.bf16.mxu0 0
        %889 = vmatpush1.bf16.xpose.msra.mxu0 0
        %890 = vmatprep.subr.bf16.mxu0 0
        %891 = vmatpush1.bf16.xpose.msra.mxu0 0
        %892 = vmatprep.subr.bf16.mxu0 0
        %893 = vmatpush1.bf16.xpose.msra.mxu0 0
        %894 = vmatprep.subr.bf16.mxu0 0
        %895 = vmatpush1.bf16.xpose.msra.mxu0 0
        %896 = vmatprep.subr.bf16.mxu0 0
        %897 = vmatpush1.bf16.xpose.msra.mxu0 0
        %898 = vmatprep.subr.bf16.mxu0 0
        %899 = vmatpush1.bf16.xpose.msra.mxu0 0
        %900 = vmatprep.subr.bf16.mxu0 0
        %901 = vmatpush1.bf16.xpose.msra.mxu0 0
        %902 = vmatprep.mubr.bf16.mxu0 0
        %903 = vmatmul.mubr.bf16.gmra.mrb[0].mxu0 %v865
        %v904 = vpop.f32.mrb[0].mxu0
        %v905 = vadd.f32 0.0, %v904
        %v906 = vpop.f32.mrb[0].mxu0
        %v907 = vpop.f32.mrb[0].mxu0
        %v908 = vpop.f32.mrb[0].mxu0
        %909 = vdwg.mxu0
        %v910 = vsel %vm629, %v905, -inf
        %911 = vmax.xlane.f32.xlu0 %v910
        %v912 = vpop.xlane.xlu0 %911
        %v913 = vsub.f32 %v905, %v912
        %v914 = vmul.f32 %v913, 1.442695
        %v915 = vpow.pop %v914
        %v916 = vsel %vm629, %v915, 0.0
        %917 = vadd.xlane.f32.xlu0 %v916
        %v918 = vpop.xlane.xlu0 %917
        %v919 = vrcp.pop %v918
        %v920 = vmul.f32 %v915, %v919
        %v921 = vpack.c.bf16 %v920, %v920
        %922 = vrot.lane.b32.xlu0 %v628, 112
        %v923 = vpop.permute.xlu0 %922
        %v925 = vsel %vm629, %v921, 0
        %v928 = vsel %vm691, %v923, 0
        %930 = vmatprep.subr.bf16.mxu0 0
        %931 = vmatpush1.bf16.msra.mxu0 %v928
        %932 = vmatprep.subr.bf16.mxu0 0
        %933 = vmatpush1.bf16.msra.mxu0 0
        %934 = vmatprep.subr.bf16.mxu0 0
        %935 = vmatpush1.bf16.msra.mxu0 0
        %936 = vmatprep.subr.bf16.mxu0 0
        %937 = vmatpush1.bf16.msra.mxu0 0
        %938 = vmatprep.subr.bf16.mxu0 0
        %939 = vmatpush1.bf16.msra.mxu0 0
        %940 = vmatprep.subr.bf16.mxu0 0
        %941 = vmatpush1.bf16.msra.mxu0 0
        %942 = vmatprep.subr.bf16.mxu0 0
        %943 = vmatpush1.bf16.msra.mxu0 0
        %944 = vmatprep.subr.bf16.mxu0 0
        %945 = vmatpush1.bf16.msra.mxu0 0
        %946 = vmatprep.subr.bf16.mxu0 0
        %947 = vmatpush1.bf16.msra.mxu0 0
        %948 = vmatprep.subr.bf16.mxu0 0
        %949 = vmatpush1.bf16.msra.mxu0 0
        %950 = vmatprep.subr.bf16.mxu0 0
        %951 = vmatpush1.bf16.msra.mxu0 0
        %952 = vmatprep.subr.bf16.mxu0 0
        %953 = vmatpush1.bf16.msra.mxu0 0
        %954 = vmatprep.subr.bf16.mxu0 0
        %955 = vmatpush1.bf16.msra.mxu0 0
        %956 = vmatprep.subr.bf16.mxu0 0
        %957 = vmatpush1.bf16.msra.mxu0 0
        %958 = vmatprep.subr.bf16.mxu0 0
        %959 = vmatpush1.bf16.msra.mxu0 0
        %960 = vmatprep.subr.bf16.mxu0 0
        %961 = vmatpush1.bf16.msra.mxu0 0
        %962 = vmatprep.mubr.bf16.mxu0 0
        %963 = vmatmul.mubr.bf16.gmra.mrb[0].mxu0 %v925
        %v964 = vpop.f32.mrb[0].mxu0
        %v965 = vadd.f32 0.0, %v964
        %v966 = vpop.f32.mrb[0].mxu0
        %v967 = vpop.f32.mrb[0].mxu0
        %v968 = vpop.f32.mrb[0].mxu0
        %969 = vdwg.mxu0
        %v970 = vpack.c.bf16 %v965, %v965
        %v972 = vunpack.c.l.b16 %v970
        %v973 = vpack.c.b16 %v972, %v972
        %974 = vrot.lane.b32.xlu0 %v973, 16
        %v975 = vpop.permute.xlu0 %974
        %vm977 = vcmask 191616
        %978 = vst.msk [vmem:[#allocation2] sm:$0xf] %vm977, %v975
        %979 = vrot.lane.b32.xlu0 %v504, 104
        %v980 = vpop.permute.xlu0 %979
        %981 = vrot.lane.b32.xlu0 %v566, 104
        %v982 = vpop.permute.xlu0 %981
        %v984 = vsel %vm629, %v980, 0
        %v987 = vsel %vm629, %v982, 0
        %989 = vmatprep.subr.bf16.mxu0 0
        %990 = vmatpush1.bf16.xpose.msra.mxu0 %v987
        %991 = vmatprep.subr.bf16.mxu0 0
        %992 = vmatpush1.bf16.xpose.msra.mxu0 0
        %993 = vmatprep.subr.bf16.mxu0 0
        %994 = vmatpush1.bf16.xpose.msra.mxu0 0
        %995 = vmatprep.subr.bf16.mxu0 0
        %996 = vmatpush1.bf16.xpose.msra.mxu0 0
        %997 = vmatprep.subr.bf16.mxu0 0
        %998 = vmatpush1.bf16.xpose.msra.mxu0 0
        %999 = vmatprep.subr.bf16.mxu0 0
        %1000 = vmatpush1.bf16.xpose.msra.mxu0 0
        %1001 = vmatprep.subr.bf16.mxu0 0
        %1002 = vmatpush1.bf16.xpose.msra.mxu0 0
        %1003 = vmatprep.subr.bf16.mxu0 0
        %1004 = vmatpush1.bf16.xpose.msra.mxu0 0
        %1005 = vmatprep.subr.bf16.mxu0 0
        %1006 = vmatpush1.bf16.xpose.msra.mxu0 0
        %1007 = vmatprep.subr.bf16.mxu0 0
        %1008 = vmatpush1.bf16.xpose.msra.mxu0 0
        %1009 = vmatprep.subr.bf16.mxu0 0
        %1010 = vmatpush1.bf16.xpose.msra.mxu0 0
        %1011 = vmatprep.subr.bf16.mxu0 0
        %1012 = vmatpush1.bf16.xpose.msra.mxu0 0
        %1013 = vmatprep.subr.bf16.mxu0 0
        %1014 = vmatpush1.bf16.xpose.msra.mxu0 0
        %1015 = vmatprep.subr.bf16.mxu0 0
        %1016 = vmatpush1.bf16.xpose.msra.mxu0 0
        %1017 = vmatprep.subr.bf16.mxu0 0
        %1018 = vmatpush1.bf16.xpose.msra.mxu0 0
        %1019 = vmatprep.subr.bf16.mxu0 0
        %1020 = vmatpush1.bf16.xpose.msra.mxu0 0
        %1021 = vmatprep.mubr.bf16.mxu0 0
        %1022 = vmatmul.mubr.bf16.gmra.mrb[0].mxu0 %v984
        %v1023 = vpop.f32.mrb[0].mxu0
        %v1024 = vadd.f32 0.0, %v1023
        %v1025 = vpop.f32.mrb[0].mxu0
        %v1026 = vpop.f32.mrb[0].mxu0
        %v1027 = vpop.f32.mrb[0].mxu0
        %1028 = vdwg.mxu0
        %v1029 = vsel %vm629, %v1024, -inf
        %1030 = vmax.xlane.f32.xlu0 %v1029
        %v1031 = vpop.xlane.xlu0 %1030
        %v1032 = vsub.f32 %v1024, %v1031
        %v1033 = vmul.f32 %v1032, 1.442695
        %v1034 = vpow.pop %v1033
        %v1035 = vsel %vm629, %v1034, 0.0
        %1036 = vadd.xlane.f32.xlu0 %v1035
        %v1037 = vpop.xlane.xlu0 %1036
        %v1038 = vrcp.pop %v1037
        %v1039 = vmul.f32 %v1034, %v1038
        %v1040 = vpack.c.bf16 %v1039, %v1039
        %1041 = vrot.lane.b32.xlu0 %v628, 104
        %v1042 = vpop.permute.xlu0 %1041
        %v1044 = vsel %vm629, %v1040, 0
        %v1047 = vsel %vm691, %v1042, 0
        %1049 = vmatprep.subr.bf16.mxu0 0
        %1050 = vmatpush1.bf16.msra.mxu0 %v1047
        %1051 = vmatprep.subr.bf16.mxu0 0
        %1052 = vmatpush1.bf16.msra.mxu0 0
        %1053 = vmatprep.subr.bf16.mxu0 0
        %1054 = vmatpush1.bf16.msra.mxu0 0
        %1055 = vmatprep.subr.bf16.mxu0 0
        %1056 = vmatpush1.bf16.msra.mxu0 0
        %1057 = vmatprep.subr.bf16.mxu0 0
        %1058 = vmatpush1.bf16.msra.mxu0 0
        %1059 = vmatprep.subr.bf16.mxu0 0
        %1060 = vmatpush1.bf16.msra.mxu0 0
        %1061 = vmatprep.subr.bf16.mxu0 0
        %1062 = vmatpush1.bf16.msra.mxu0 0
        %1063 = vmatprep.subr.bf16.mxu0 0
        %1064 = vmatpush1.bf16.msra.mxu0 0
        %1065 = vmatprep.subr.bf16.mxu0 0
        %1066 = vmatpush1.bf16.msra.mxu0 0
        %1067 = vmatprep.subr.bf16.mxu0 0
        %1068 = vmatpush1.bf16.msra.mxu0 0
        %1069 = vmatprep.subr.bf16.mxu0 0
        %1070 = vmatpush1.bf16.msra.mxu0 0
        %1071 = vmatprep.subr.bf16.mxu0 0
        %1072 = vmatpush1.bf16.msra.mxu0 0
        %1073 = vmatprep.subr.bf16.mxu0 0
        %1074 = vmatpush1.bf16.msra.mxu0 0
        %1075 = vmatprep.subr.bf16.mxu0 0
        %1076 = vmatpush1.bf16.msra.mxu0 0
        %1077 = vmatprep.subr.bf16.mxu0 0
        %1078 = vmatpush1.bf16.msra.mxu0 0
        %1079 = vmatprep.subr.bf16.mxu0 0
        %1080 = vmatpush1.bf16.msra.mxu0 0
        %1081 = vmatprep.mubr.bf16.mxu0 0
        %1082 = vmatmul.mubr.bf16.gmra.mrb[0].mxu0 %v1044
        %v1083 = vpop.f32.mrb[0].mxu0
        %v1084 = vadd.f32 0.0, %v1083
        %v1085 = vpop.f32.mrb[0].mxu0
        %v1086 = vpop.f32.mrb[0].mxu0
        %v1087 = vpop.f32.mrb[0].mxu0
        %1088 = vdwg.mxu0
        %v1089 = vpack.c.bf16 %v1084, %v1084
        %v1091 = vunpack.c.l.b16 %v1089
        %v1092 = vpack.c.b16 %v1091, %v1091
        %1093 = vrot.lane.b32.xlu0 %v1092, 24
        %v1094 = vpop.permute.xlu0 %1093
        %vm1096 = vcmask 257216
        %1097 = vst.msk [vmem:[#allocation2] sm:$0xf] %vm1096, %v1094
        %v1098 = vld [vmem:[#allocation2] sm:$0xf]
        %v1100 = vlaneseq
        %v1101 = vshrl.u32 %v1100, 7
        %v1102 = vsub.s32 0, %v1101
        %v1103 = vrot.slane %v435, %v1102
        %v1109 = vunpack.c.l.b16 %v426
        %v1110 = vunpack.c.l.b16 %v427
        %v1111 = vunpack.c.l.b16 %v428
        %v1112 = vunpack.c.l.b16 %v429
        %v1113 = vpack.c.b16 %v1110, %v1109
        %v1114 = vpack.c.b16 %v1112, %v1111
        %v1118 = vsel %vm460, %v1098, 0
        %1120 = vmatprep.subr.bf16.mxu0 0
        %1121 = vmatpush1.bf16.msra.mxu0 %v1113
        %1122 = vmatprep.subr.bf16.mxu0 0
        %1123 = vmatpush1.bf16.msra.mxu0 %v1114
        %1124 = vmatprep.subr.bf16.mxu0 0
        %1125 = vmatpush1.bf16.msra.mxu0 0
        %1126 = vmatprep.subr.bf16.mxu0 0
        %1127 = vmatpush1.bf16.msra.mxu0 0
        %1128 = vmatprep.subr.bf16.mxu0 0
        %1129 = vmatpush1.bf16.msra.mxu0 0
        %1130 = vmatprep.subr.bf16.mxu0 0
        %1131 = vmatpush1.bf16.msra.mxu0 0
        %1132 = vmatprep.subr.bf16.mxu0 0
        %1133 = vmatpush1.bf16.msra.mxu0 0
        %1134 = vmatprep.subr.bf16.mxu0 0
        %1135 = vmatpush1.bf16.msra.mxu0 0
        %1136 = vmatprep.subr.bf16.mxu0 0
        %1137 = vmatpush1.bf16.msra.mxu0 0
        %1138 = vmatprep.subr.bf16.mxu0 0
        %1139 = vmatpush1.bf16.msra.mxu0 0
        %1140 = vmatprep.subr.bf16.mxu0 0
        %1141 = vmatpush1.bf16.msra.mxu0 0
        %1142 = vmatprep.subr.bf16.mxu0 0
        %1143 = vmatpush1.bf16.msra.mxu0 0
        %1144 = vmatprep.subr.bf16.mxu0 0
        %1145 = vmatpush1.bf16.msra.mxu0 0
        %1146 = vmatprep.subr.bf16.mxu0 0
        %1147 = vmatpush1.bf16.msra.mxu0 0
        %1148 = vmatprep.subr.bf16.mxu0 0
        %1149 = vmatpush1.bf16.msra.mxu0 0
        %1150 = vmatprep.subr.bf16.mxu0 0
        %1151 = vmatpush1.bf16.msra.mxu0 0
        %1152 = vmatprep.mubr.bf16.mxu0 0
        %1153 = vmatmul.mubr.bf16.gmra.mrb[0].mxu0 %v1118
        %v1154 = vpop.f32.mrb[0].mxu0
        %v1155 = vadd.f32 %v1103, %v1154
        %v1156 = vpop.f32.mrb[0].mxu0
        %v1157 = vpop.f32.mrb[0].mxu0
        %v1158 = vpop.f32.mrb[0].mxu0
        %1159 = vdwg.mxu0
        %1160 = vst.msk [vmem:[%s410] sm:$0xff] %vm460, %v1155
        %s1161 = sand.u32 %s214, 1
        %s1162 = scalar_lea.sflag [#allocation5], %s1161
        %s1163 = sand.u32 %s214, 1
        %s1164 = smul.addr %s1163, 8
        %s1165 = scalar_lea.vmem [#allocation12], %s1164
        // Predicated region
        $region69: #{tpu_custom_call.1} parent=47 // pred_check
          %p1166 = pneg %p224
        $region70: #{tpu_custom_call.1} parent=47 // pred_check_branch
          %1168 = sbr.rel (%p1166) target = $region72
        $region71: #{tpu_custom_call.1} parent=47 // pred_region
          %s1170 = ssub.s32 128, 128
          %1171 = vsyncadd %s1162, %s1170
          %s1172 = sadd.s32 %s33, %s32
          %s1173 = smul.addr %s1172, 128
          %s1174 = scalar_lea.hbm %s7, %s1173
          %s1176 = sshll.u32 %s1165, 4
          %s1177 = int_to_ptr.vmem [resolvable:$true] %s1176
          %1179 = dma.vmem_to_hbm [thread:$0]  %s1177, 128, %s1174, %s1162
        $region72: #{tpu_custom_call.1} parent=47 // pred_fallthru
          _
      $region48: #{tpu_custom_call.1} parent=5 // pred_fallthru
        _
      %p1180 = scmp.le.s32.totalorder 2, %s23
      // Predicated region
      $region73: #{tpu_custom_call.1} parent=5 // pred_check
        %p1181 = pneg %p1180
      $region74: #{tpu_custom_call.1} parent=5 // pred_check_branch
        %1183 = sbr.rel (%p1181) target = $region76
      $region75: #{tpu_custom_call.1} parent=5 // pred_region
        %s1184 = ssub.s32 %s23, 2
        // Predicated region
        $region77: #{tpu_custom_call.1} parent=75 // pred_check
          %p1185 = pneg %p230
        $region78: #{tpu_custom_call.1} parent=75 // pred_check_branch
          %1187 = sbr.rel (%p1185) target = $region80
        $region79: #{tpu_custom_call.1} parent=75 // pred_region
          %s1188 = sand.u32 %s215, 1
          %s1189 = scalar_lea.sflag [#allocation5], %s1188
          %s1190 = sand.u32 %s215, 1
          %s1191 = smul.addr %s1190, 8
          %s1192 = scalar_lea.vmem [#allocation12], %s1191
          %1193 = dma.done %s1189, 128
        $region80: #{tpu_custom_call.1} parent=75 // pred_fallthru
          _
      $region76: #{tpu_custom_call.1} parent=5 // pred_fallthru
        _
    $region6: #{tpu_custom_call.1} parent=1 // loop_footer
      %s27 = sadd.s32 1, %s23
    $region7: #{tpu_custom_call.1} parent=1 // loop_footer_branch
      %22 = sbr.rel target = $region3
    $region8: #{tpu_custom_call.1} parent=1 // loop_exit
      _
    %1194 = vsyncpa [#allocation4], 1
    %s1195 = scalar_lea.sflag [#allocation4], 1
    %1196 = vsyncpa %s1195, 1
    %1197 = vsyncpa [#allocation7], 1
    %s1198 = scalar_lea.sflag [#allocation7], 1
    %1199 = vsyncpa %s1198, 1
    %1200 = vsyncpa [#allocation10], 1
    %1201 = vsyncpa [#allocation5], 1
    %s1202 = scalar_lea.sflag [#allocation5], 1
    %1203 = vsyncpa %s1202, 1

</llo_original>
